<compile_context>
chip_gen: v5e
topology: v5e:2x2
jax: 0.10.0
libtpu: 0.0.40
codegen_flags: <defaults>
</compile_context>

<pallas_src>
import jax
import jax.numpy as jnp
from jax.experimental import pallas as pl
from jax.experimental.pallas import tpu as pltpu


def _upsample2x_kernel(x_ref, o_ref):
    x = x_ref[...]                                   # (tm, W)
    tm, w = x.shape
    # Width x2: lane interleave [x0,x0,x1,x1,...]  (== jnp.repeat(x, 2, axis=1)).
    y = jax.lax.broadcast_in_dim(x, (tm, w, 2), (0, 1)).reshape(tm, 2 * w)
    # Height x2: the two upsampled output rows of one input row are adjacent in
    # NCHW memory, i.e. the (tm, 4W) output row is [y | y].
    o_ref[:, : 2 * w] = y
    o_ref[:, 2 * w:] = y


def _round_up(x, m):
    return -(-x // m) * m


def _pick_row_tile(M, W, itemsize):
    """Rows of the flat (M, W) input processed per grid step."""
    mult = max(8, 32 // max(1, itemsize))            # 8 rows f32, 16 bf16, 32 int8
    # VMEM bytes per processed row: double-buffered in/out blocks plus the
    # lane-padded (rows, W, 2) broadcast temp and the (rows, 2W) interleaved row.
    per_row = (2 * _round_up(W, 128) * itemsize
               + 2 * _round_up(4 * W, 128) * itemsize
               + _round_up(W, 8) // 8 * 4096
               + _round_up(2 * W, 128) * itemsize)
    budget = 6 * 1024 * 1024                         # well under every gen's scoped VMEM
    target = min(2048, max(mult, budget // per_row // mult * mult))

    divs = set()
    d = 1
    while d * d <= M:
        if M % d == 0:
            divs.add(d)
            divs.add(M // d)
        d += 1
    # Best: exact divisor (no ragged block), sublane-aligned, >=2 grid steps
    # (so both v7x TensorCores get work under dimension_semantics='parallel').
    good = [d for d in divs if d <= target and d % mult == 0 and M // d >= 2]
    if good:
        return max(good)
    good = [d for d in divs if d <= target and d % mult == 0]
    if good:
        return max(good)
    if M <= target:
        return M                                     # single full-extent block
    return target                                    # ragged last block (masked by Pallas)


def upsample_nearest_2x(x_nchw):
    """Forward of UpSampleLayer: nearest-neighbour 2x upsample of NCHW input."""
    N, C, H, W = x_nchw.shape
    M = N * C * H
    itemsize = jnp.dtype(x_nchw.dtype).itemsize

    x2d = x_nchw.reshape(M, W)                       # free view of contiguous NCHW memory
    tm = _pick_row_tile(M, W, itemsize)
    grid = pl.cdiv(M, tm)

    out2d = pl.pallas_call(
        _upsample2x_kernel,
        out_shape=jax.ShapeDtypeStruct((M, 4 * W), x_nchw.dtype),
        grid_spec=pl.GridSpec(
            grid=(grid,),
            in_specs=[pl.BlockSpec((tm, W), lambda i: (i, 0))],
            out_specs=pl.BlockSpec((tm, 4 * W), lambda i: (i, 0)),
        ),
        compiler_params=pltpu.CompilerParams(
            dimension_semantics=("parallel",),
            vmem_limit_bytes=32 * 1024 * 1024,
        ),
        cost_estimate=pl.CostEstimate(
            flops=0,
            transcendentals=0,
            bytes_accessed=5 * M * W * itemsize,      # read 1x input, write 4x
        ),
    )(x2d)

    # Free view back to NCHW: row k of (M, 4W) holds output rows (2k, 2k+1).
    return out2d.reshape(N, C, 2 * H, 2 * W)


if __name__ == "__main__":
    N, C, H, W = 2, 4, 16, 16
    key = jax.random.PRNGKey(0)
    x = jax.random.normal(key, (N, C, H, W), dtype=jnp.float32)

    y = jax.jit(upsample_nearest_2x)(x)
    y = jax.block_until_ready(y)

    # Reference: nearest-neighbor 2x upsample (== F.interpolate mode='nearest').
    ref = jnp.repeat(jnp.repeat(x, 2, axis=2), 2, axis=3)

    assert y.shape == (N, C, 2 * H, 2 * W), y.shape
    assert bool(jnp.array_equal(y, ref)), float(jnp.max(jnp.abs(y - ref)))
    print("KERNEL_OK")
</pallas_src>

<mosaic_0001>
module attributes {stable_mosaic.version = 11 : i64} {
  func.func @_upsample2x_kernel(%arg0: i32, %arg1: memref<64x16xf32, #tpu.memory_space<vmem>>, %arg2: memref<64x64xf32, #tpu.memory_space<vmem>>) attributes {dimension_semantics = [#tpu.dimension_semantics<parallel>], iteration_bounds = array<i64: 2>, scalar_prefetch = 0 : i64, scratch_operands = 0 : i64, tpu.core_type = #tpu.core_type<tc>, window_params = [{transform_indices = @transform_0, window_bounds = array<i64: 64, 16>}, {transform_indices = @transform_1, window_bounds = array<i64: 64, 64>}]} {
    %c0 = arith.constant 0 : index
    %c0_0 = arith.constant 0 : index
    %0 = vector.load %arg1[%c0, %c0_0] : memref<64x16xf32, #tpu.memory_space<vmem>>, vector<64x16xf32>
    %1 = vector.shape_cast %0 : vector<64x16xf32> to vector<64x16x1xf32>
    %2 = vector.broadcast %1 : vector<64x16x1xf32> to vector<64x16x2xf32>
    %3 = vector.shape_cast %2 : vector<64x16x2xf32> to vector<64x32xf32>
    %c0_1 = arith.constant 0 : index
    %c0_2 = arith.constant 0 : index
    %4 = vector.load %arg2[%c0_1, %c0_2] : memref<64x64xf32, #tpu.memory_space<vmem>>, vector<64x32xf32>
    tpu.vector_store %arg2[%c0_1, %c0_2], %3 {strides = array<i32>} : memref<64x64xf32, #tpu.memory_space<vmem>>, vector<64x32xf32>,
    %c0_3 = arith.constant 0 : index
    %c32 = arith.constant 32 : index
    %5 = vector.load %arg2[%c0_3, %c32] : memref<64x64xf32, #tpu.memory_space<vmem>>, vector<64x32xf32>
    tpu.vector_store %arg2[%c0_3, %c32], %3 {strides = array<i32>} : memref<64x64xf32, #tpu.memory_space<vmem>>, vector<64x32xf32>,
    return
  }
  func.func @transform_0(%arg0: i32) -> (i32, i32) {
    %c0_i32 = arith.constant 0 : i32
    %c0_i32_0 = arith.constant 0 : i32
    return %arg0, %c0_i32 : i32, i32
  }
  func.func @transform_1(%arg0: i32) -> (i32, i32) {
    %c0_i32 = arith.constant 0 : i32
    %c0_i32_0 = arith.constant 0 : i32
    return %arg0, %c0_i32 : i32, i32
  }
}

</mosaic_0001>

<llo_original>
// kernel: upsample_nearest_2x.1
$region0: #{upsample_nearest_2x.1}
  #allocation0 [shape = 'u32[]', space=smem, size = 0x4, offset = 0x4, fixed_abs, tag = 'smem constant byte address 0x4 - core index']
  #allocation1 [shape = 'u32[72,128]{1,0:T(1,128)}', space=vmem, size = 0x9000, scoped, tag = 'internal scratch']
  %s0 = inlined_call_operand.hbm [shape: f32[128,16], index: 0, kind: input, shape index: {}]
  %s1 = inlined_call_operand.vmem [shape: f32[128,64], index: 1, kind: output, shape index: {}]
  %s2 = sld [smem:[#allocation0]]
  $region41: #{upsample_nearest_2x.1} parent=0
    _
  %s4 = ssub.s32 1, %s2
  %s5 = scalar_select 0, %s4, %s2
  $region1: #{upsample_nearest_2x.1} parent=0
    #allocation2 [shape = 'u8[65536]{0}', space=vmem, size = 0x10000, scoped, tag = 'input window, operand 0']
    #allocation3 [shape = 's32[2]{0}', space=sflag, size = 0x8, scoped, tag = 'scoped memory for upsample_nearest_2x.1']
    %6 = vsyncpa [#allocation3], 0
    %s7 = scalar_lea.sflag [#allocation3], 1
    %8 = vsyncpa %s7, 0
    loop: start=0, step=1, limit=4
    $region2: #{upsample_nearest_2x.1} parent=1 // loop_pre_header
      _
    $region3: #{upsample_nearest_2x.1} parent=1 // loop_header
      %s10 = sphi 0, %s14
      %p11 = scmp.ge.s32.totalorder %s10, 4
      %s20 = sphi 0, %s22
      %s23 = sphi 0, %s20
      %s24 = sphi 0, %s23
      %s40 = sphi 0, %s24
      %s46 = sphi 0, %s48
      %s49 = sphi 0, %s46
      %s50 = sphi 0, %s49
      %s66 = sphi 0, %s50
    $region4: #{upsample_nearest_2x.1} parent=1 // loop_header_branch
      %13 = sbr.rel (%p11) target = $region8
    $region5: #{upsample_nearest_2x.1} parent=1 // loop_body
      %s15 = ssub.s32 %s10, 1
      %s16 = ssub.s32 %s10, 2
      %s17 = sadd.s32 %s10, 1
      %s18 = ssub.s32 %s10, %s17
      %p19 = scmp.eq.s32.totalorder %s18, 0
      %s21 = sadd.s32 %s20, 1
      %s22 = scalar_select %p19, %s20, %s21
      %p25 = pneg %p19
      %p26 = scmp.eq.s32.totalorder %s10, 1
      %p27 = por %p25, %p26
      %p28 = scmp.ne.s32.totalorder %s20, %s23
      %p29 = scmp.eq.s32.totalorder %s10, 0
      %p30 = por %p28, %p29
      %p31 = scmp.ne.s32.totalorder %s20, %s23
      %p32 = scmp.eq.s32.totalorder %s15, 1
      %p33 = por %p31, %p32
      %p34 = scmp.ne.s32.totalorder %s23, %s24
      %p35 = scmp.eq.s32.totalorder %s15, 0
      %p36 = por %p34, %p35
      %p37 = scmp.ne.s32.totalorder %s23, %s24
      %p38 = scmp.eq.s32.totalorder %s16, 1
      %p39 = por %p37, %p38
      %p41 = scmp.ne.s32.totalorder %s24, %s40
      %p42 = scmp.eq.s32.totalorder %s16, 0
      %p43 = por %p41, %p42
      %s44 = ssub.s32 %s10, %s17
      %p45 = scmp.eq.s32.totalorder %s44, 0
      %s47 = sadd.s32 %s46, 1
      %s48 = scalar_select %p45, %s46, %s47
      %p51 = pneg %p45
      %p52 = scmp.eq.s32.totalorder %s10, 1
      %p53 = por %p51, %p52
      %p54 = scmp.ne.s32.totalorder %s46, %s49
      %p55 = scmp.eq.s32.totalorder %s10, 0
      %p56 = por %p54, %p55
      %p57 = scmp.ne.s32.totalorder %s46, %s49
      %p58 = scmp.eq.s32.totalorder %s15, 1
      %p59 = por %p57, %p58
      %p60 = scmp.ne.s32.totalorder %s49, %s50
      %p61 = scmp.eq.s32.totalorder %s15, 0
      %p62 = por %p60, %p61
      %p63 = scmp.ne.s32.totalorder %s49, %s50
      %p64 = scmp.eq.s32.totalorder %s16, 1
      %p65 = por %p63, %p64
      %p67 = scmp.ne.s32.totalorder %s50, %s66
      %p68 = scmp.eq.s32.totalorder %s16, 0
      %p69 = por %p67, %p68
      %p70 = scmp.le.s32.totalorder 1, %s10
      %p71 = scmp.lt.s32.totalorder %s10, 3
      %p72 = pnand %p70, %p71
      %p73 = pneg %p72
      // Predicated region
      $region9: #{upsample_nearest_2x.1} parent=5 // pred_check
        _
      $region10: #{upsample_nearest_2x.1} parent=5 // pred_check_branch
        %75 = sbr.rel (%p72) target = $region12
      $region11: #{upsample_nearest_2x.1} parent=5 // pred_region
        %s76 = ssub.s32 %s10, 1
      $region12: #{upsample_nearest_2x.1} parent=5 // pred_fallthru
        _
      %p77 = scmp.lt.s32.totalorder %s10, 2
      // Predicated region
      $region13: #{upsample_nearest_2x.1} parent=5 // pred_check
        %p78 = pneg %p77
      $region14: #{upsample_nearest_2x.1} parent=5 // pred_check_branch
        %80 = sbr.rel (%p78) target = $region16
      $region15: #{upsample_nearest_2x.1} parent=5 // pred_region
        // Predicated region
        $region17: #{upsample_nearest_2x.1} parent=15 // pred_check
          %p81 = pneg %p30
        $region18: #{upsample_nearest_2x.1} parent=15 // pred_check_branch
          %83 = sbr.rel (%p81) target = $region20
        $region19: #{upsample_nearest_2x.1} parent=15 // pred_region
          %s84 = sand.u32 %s20, 1
          %s85 = scalar_lea.sflag [#allocation3], %s84
          %s86 = sand.u32 %s20, 1
          %s87 = smul.addr %s86, 64
          %s88 = scalar_lea.vmem [#allocation2], %s87
          %s89 = smul.u32 8, %s10
          %91 = vsyncadd %s85, 0
          %s92 = smul.addr %s89, 8
          %s93 = scalar_lea.hbm %s0, %s92
          %s94 = sshll.u32 %s93, 4
          %s95 = int_to_ptr.hbm [resolvable:$true] %s94
          %s96 = sshll.u32 %s88, 4
          %s97 = int_to_ptr.vmem [resolvable:$true] %s96
          %102 = dma.hbm_to_vmem [thread:$0]  %s95, 1024, %s97, %s85, 128, 128, 8
        $region20: #{upsample_nearest_2x.1} parent=15 // pred_fallthru
          _
      $region16: #{upsample_nearest_2x.1} parent=5 // pred_fallthru
        _
      %p103 = scmp.le.s32.totalorder 1, %s10
      %p104 = scmp.lt.s32.totalorder %s10, 3
      %p105 = pnand %p103, %p104
      %p106 = pneg %p105
      // Predicated region
      $region21: #{upsample_nearest_2x.1} parent=5 // pred_check
        _
      $region22: #{upsample_nearest_2x.1} parent=5 // pred_check_branch
        %108 = sbr.rel (%p105) target = $region24
      $region23: #{upsample_nearest_2x.1} parent=5 // pred_region
        %s109 = ssub.s32 %s10, 1
        %s110 = sand.u32 %s23, 1
        %s111 = scalar_lea.sflag [#allocation3], %s110
        %s112 = sand.u32 %s23, 1
        %s113 = smul.addr %s112, 64
        %s114 = scalar_lea.vmem [#allocation2], %s113
        // Predicated region
        $region25: #{upsample_nearest_2x.1} parent=23 // pred_check
          %p115 = pneg %p36
        $region26: #{upsample_nearest_2x.1} parent=23 // pred_check_branch
          %117 = sbr.rel (%p115) target = $region28
        $region27: #{upsample_nearest_2x.1} parent=23 // pred_region
          %119 = dma.done %s111, 1024
        $region28: #{upsample_nearest_2x.1} parent=23 // pred_fallthru
          _
        %s120 = sand.u32 %s23, 1
        %s121 = scalar_lea.sflag [#allocation3], %s120
        %s122 = sand.u32 %s23, 1
        %s123 = smul.addr %s122, 64
        %s124 = scalar_lea.vmem [#allocation2], %s123
        %p125 = pneg %p36
        %p126 = pneg %p33
        %p127 = pneg %p62
        %p128 = pneg %p59
        %s129 = smul.u32 8, %s15
        %p130 = scmp.lt.s32.totalorder %s129, 15
        %s131 = scalar_select %p130, %s129, 15
        %s132 = smul.addr %s131, 8
        %s133 = scalar_lea.vmem %s1, %s132
        %s134 = smul.u32 8, %s15
        %s135 = smul.u32 8, %s15
        %p136 = scmp.lt.s32.totalorder %s135, 15
        %s137 = scalar_select %p136, %s135, 15
        %s138 = smul.addr %s137, 8
        %s139 = scalar_lea.vmem %s1, %s138
        %s140 = smul.u32 8, %s15
        %v141 = vld [vmem:[%s114] sm:$0xff]
        %v142 = vld [vmem:[%s114 + $0x8] sm:$0xff]
        %v143 = vld [vmem:[%s114 + $0x10] sm:$0xff]
        %v144 = vld [vmem:[%s114 + $0x18] sm:$0xff]
        %v145 = vld [vmem:[%s114 + $0x20] sm:$0xff]
        %v146 = vld [vmem:[%s114 + $0x28] sm:$0xff]
        %v147 = vld [vmem:[%s114 + $0x30] sm:$0xff]
        %v148 = vld [vmem:[%s114 + $0x38] sm:$0xff]
        %v149 = vperm.slane %v141, 0
        %v150 = vlaneseq
        %v151 = vshrl.u32 %v150, 7
        %153 = vset.pattern.permute.xlu0 %v151
        %154 = vperm.xlu0 %153, %v149
        %v155 = vpop.permute.xlu0 %154
        %v156 = vlaneseq
        %v157 = vshrl.u32 %v156, 7
        %v158 = vadd.s32 %v157, 8
        %159 = vset.pattern.permute.xlu0 %v158
        %160 = vperm.xlu0 %159, %v149
        %v161 = vpop.permute.xlu0 %160
        %v162 = vperm.slane %v141, 1
        %v163 = vlaneseq
        %v164 = vshrl.u32 %v163, 7
        %166 = vset.pattern.permute.xlu0 %v164
        %167 = vperm.xlu0 %166, %v162
        %v168 = vpop.permute.xlu0 %167
        %v169 = vlaneseq
        %v170 = vshrl.u32 %v169, 7
        %v171 = vadd.s32 %v170, 8
        %172 = vset.pattern.permute.xlu0 %v171
        %173 = vperm.xlu0 %172, %v162
        %v174 = vpop.permute.xlu0 %173
        %v175 = vperm.slane %v141, 2
        %v176 = vlaneseq
        %v177 = vshrl.u32 %v176, 7
        %179 = vset.pattern.permute.xlu0 %v177
        %180 = vperm.xlu0 %179, %v175
        %v181 = vpop.permute.xlu0 %180
        %v182 = vlaneseq
        %v183 = vshrl.u32 %v182, 7
        %v184 = vadd.s32 %v183, 8
        %185 = vset.pattern.permute.xlu0 %v184
        %186 = vperm.xlu0 %185, %v175
        %v187 = vpop.permute.xlu0 %186
        %v188 = vperm.slane %v141, 3
        %v189 = vlaneseq
        %v190 = vshrl.u32 %v189, 7
        %192 = vset.pattern.permute.xlu0 %v190
        %193 = vperm.xlu0 %192, %v188
        %v194 = vpop.permute.xlu0 %193
        %v195 = vlaneseq
        %v196 = vshrl.u32 %v195, 7
        %v197 = vadd.s32 %v196, 8
        %198 = vset.pattern.permute.xlu0 %v197
        %199 = vperm.xlu0 %198, %v188
        %v200 = vpop.permute.xlu0 %199
        %v201 = vperm.slane %v141, 4
        %v202 = vlaneseq
        %v203 = vshrl.u32 %v202, 7
        %205 = vset.pattern.permute.xlu0 %v203
        %206 = vperm.xlu0 %205, %v201
        %v207 = vpop.permute.xlu0 %206
        %v208 = vlaneseq
        %v209 = vshrl.u32 %v208, 7
        %v210 = vadd.s32 %v209, 8
        %211 = vset.pattern.permute.xlu0 %v210
        %212 = vperm.xlu0 %211, %v201
        %v213 = vpop.permute.xlu0 %212
        %v214 = vperm.slane %v141, 5
        %v215 = vlaneseq
        %v216 = vshrl.u32 %v215, 7
        %218 = vset.pattern.permute.xlu0 %v216
        %219 = vperm.xlu0 %218, %v214
        %v220 = vpop.permute.xlu0 %219
        %v221 = vlaneseq
        %v222 = vshrl.u32 %v221, 7
        %v223 = vadd.s32 %v222, 8
        %224 = vset.pattern.permute.xlu0 %v223
        %225 = vperm.xlu0 %224, %v214
        %v226 = vpop.permute.xlu0 %225
        %v227 = vperm.slane %v141, 6
        %v228 = vlaneseq
        %v229 = vshrl.u32 %v228, 7
        %231 = vset.pattern.permute.xlu0 %v229
        %232 = vperm.xlu0 %231, %v227
        %v233 = vpop.permute.xlu0 %232
        %v234 = vlaneseq
        %v235 = vshrl.u32 %v234, 7
        %v236 = vadd.s32 %v235, 8
        %237 = vset.pattern.permute.xlu0 %v236
        %238 = vperm.xlu0 %237, %v227
        %v239 = vpop.permute.xlu0 %238
        %v240 = vperm.slane %v141, 7
        %v241 = vlaneseq
        %v242 = vshrl.u32 %v241, 7
        %244 = vset.pattern.permute.xlu0 %v242
        %245 = vperm.xlu0 %244, %v240
        %v246 = vpop.permute.xlu0 %245
        %v247 = vlaneseq
        %v248 = vshrl.u32 %v247, 7
        %v249 = vadd.s32 %v248, 8
        %250 = vset.pattern.permute.xlu0 %v249
        %251 = vperm.xlu0 %250, %v240
        %v252 = vpop.permute.xlu0 %251
        %v253 = vperm.slane %v142, 0
        %v254 = vlaneseq
        %v255 = vshrl.u32 %v254, 7
        %257 = vset.pattern.permute.xlu0 %v255
        %258 = vperm.xlu0 %257, %v253
        %v259 = vpop.permute.xlu0 %258
        %v260 = vlaneseq
        %v261 = vshrl.u32 %v260, 7
        %v262 = vadd.s32 %v261, 8
        %263 = vset.pattern.permute.xlu0 %v262
        %264 = vperm.xlu0 %263, %v253
        %v265 = vpop.permute.xlu0 %264
        %v266 = vperm.slane %v142, 1
        %v267 = vlaneseq
        %v268 = vshrl.u32 %v267, 7
        %270 = vset.pattern.permute.xlu0 %v268
        %271 = vperm.xlu0 %270, %v266
        %v272 = vpop.permute.xlu0 %271
        %v273 = vlaneseq
        %v274 = vshrl.u32 %v273, 7
        %v275 = vadd.s32 %v274, 8
        %276 = vset.pattern.permute.xlu0 %v275
        %277 = vperm.xlu0 %276, %v266
        %v278 = vpop.permute.xlu0 %277
        %v279 = vperm.slane %v142, 2
        %v280 = vlaneseq
        %v281 = vshrl.u32 %v280, 7
        %283 = vset.pattern.permute.xlu0 %v281
        %284 = vperm.xlu0 %283, %v279
        %v285 = vpop.permute.xlu0 %284
        %v286 = vlaneseq
        %v287 = vshrl.u32 %v286, 7
        %v288 = vadd.s32 %v287, 8
        %289 = vset.pattern.permute.xlu0 %v288
        %290 = vperm.xlu0 %289, %v279
        %v291 = vpop.permute.xlu0 %290
        %v292 = vperm.slane %v142, 3
        %v293 = vlaneseq
        %v294 = vshrl.u32 %v293, 7
        %296 = vset.pattern.permute.xlu0 %v294
        %297 = vperm.xlu0 %296, %v292
        %v298 = vpop.permute.xlu0 %297
        %v299 = vlaneseq
        %v300 = vshrl.u32 %v299, 7
        %v301 = vadd.s32 %v300, 8
        %302 = vset.pattern.permute.xlu0 %v301
        %303 = vperm.xlu0 %302, %v292
        %v304 = vpop.permute.xlu0 %303
        %v305 = vperm.slane %v142, 4
        %v306 = vlaneseq
        %v307 = vshrl.u32 %v306, 7
        %309 = vset.pattern.permute.xlu0 %v307
        %310 = vperm.xlu0 %309, %v305
        %v311 = vpop.permute.xlu0 %310
        %v312 = vlaneseq
        %v313 = vshrl.u32 %v312, 7
        %v314 = vadd.s32 %v313, 8
        %315 = vset.pattern.permute.xlu0 %v314
        %316 = vperm.xlu0 %315, %v305
        %v317 = vpop.permute.xlu0 %316
        %v318 = vperm.slane %v142, 5
        %v319 = vlaneseq
        %v320 = vshrl.u32 %v319, 7
        %322 = vset.pattern.permute.xlu0 %v320
        %323 = vperm.xlu0 %322, %v318
        %v324 = vpop.permute.xlu0 %323
        %v325 = vlaneseq
        %v326 = vshrl.u32 %v325, 7
        %v327 = vadd.s32 %v326, 8
        %328 = vset.pattern.permute.xlu0 %v327
        %329 = vperm.xlu0 %328, %v318
        %v330 = vpop.permute.xlu0 %329
        %v331 = vperm.slane %v142, 6
        %v332 = vlaneseq
        %v333 = vshrl.u32 %v332, 7
        %335 = vset.pattern.permute.xlu0 %v333
        %336 = vperm.xlu0 %335, %v331
        %v337 = vpop.permute.xlu0 %336
        %v338 = vlaneseq
        %v339 = vshrl.u32 %v338, 7
        %v340 = vadd.s32 %v339, 8
        %341 = vset.pattern.permute.xlu0 %v340
        %342 = vperm.xlu0 %341, %v331
        %v343 = vpop.permute.xlu0 %342
        %v344 = vperm.slane %v142, 7
        %v345 = vlaneseq
        %v346 = vshrl.u32 %v345, 7
        %348 = vset.pattern.permute.xlu0 %v346
        %349 = vperm.xlu0 %348, %v344
        %v350 = vpop.permute.xlu0 %349
        %v351 = vlaneseq
        %v352 = vshrl.u32 %v351, 7
        %v353 = vadd.s32 %v352, 8
        %354 = vset.pattern.permute.xlu0 %v353
        %355 = vperm.xlu0 %354, %v344
        %v356 = vpop.permute.xlu0 %355
        %v357 = vperm.slane %v143, 0
        %v358 = vlaneseq
        %v359 = vshrl.u32 %v358, 7
        %361 = vset.pattern.permute.xlu0 %v359
        %362 = vperm.xlu0 %361, %v357
        %v363 = vpop.permute.xlu0 %362
        %v364 = vlaneseq
        %v365 = vshrl.u32 %v364, 7
        %v366 = vadd.s32 %v365, 8
        %367 = vset.pattern.permute.xlu0 %v366
        %368 = vperm.xlu0 %367, %v357
        %v369 = vpop.permute.xlu0 %368
        %v370 = vperm.slane %v143, 1
        %v371 = vlaneseq
        %v372 = vshrl.u32 %v371, 7
        %374 = vset.pattern.permute.xlu0 %v372
        %375 = vperm.xlu0 %374, %v370
        %v376 = vpop.permute.xlu0 %375
        %v377 = vlaneseq
        %v378 = vshrl.u32 %v377, 7
        %v379 = vadd.s32 %v378, 8
        %380 = vset.pattern.permute.xlu0 %v379
        %381 = vperm.xlu0 %380, %v370
        %v382 = vpop.permute.xlu0 %381
        %v383 = vperm.slane %v143, 2
        %v384 = vlaneseq
        %v385 = vshrl.u32 %v384, 7
        %387 = vset.pattern.permute.xlu0 %v385
        %388 = vperm.xlu0 %387, %v383
        %v389 = vpop.permute.xlu0 %388
        %v390 = vlaneseq
        %v391 = vshrl.u32 %v390, 7
        %v392 = vadd.s32 %v391, 8
        %393 = vset.pattern.permute.xlu0 %v392
        %394 = vperm.xlu0 %393, %v383
        %v395 = vpop.permute.xlu0 %394
        %v396 = vperm.slane %v143, 3
        %v397 = vlaneseq
        %v398 = vshrl.u32 %v397, 7
        %400 = vset.pattern.permute.xlu0 %v398
        %401 = vperm.xlu0 %400, %v396
        %v402 = vpop.permute.xlu0 %401
        %v403 = vlaneseq
        %v404 = vshrl.u32 %v403, 7
        %v405 = vadd.s32 %v404, 8
        %406 = vset.pattern.permute.xlu0 %v405
        %407 = vperm.xlu0 %406, %v396
        %v408 = vpop.permute.xlu0 %407
        %v409 = vperm.slane %v143, 4
        %v410 = vlaneseq
        %v411 = vshrl.u32 %v410, 7
        %413 = vset.pattern.permute.xlu0 %v411
        %414 = vperm.xlu0 %413, %v409
        %v415 = vpop.permute.xlu0 %414
        %v416 = vlaneseq
        %v417 = vshrl.u32 %v416, 7
        %v418 = vadd.s32 %v417, 8
        %419 = vset.pattern.permute.xlu0 %v418
        %420 = vperm.xlu0 %419, %v409
        %v421 = vpop.permute.xlu0 %420
        %v422 = vperm.slane %v143, 5
        %v423 = vlaneseq
        %v424 = vshrl.u32 %v423, 7
        %426 = vset.pattern.permute.xlu0 %v424
        %427 = vperm.xlu0 %426, %v422
        %v428 = vpop.permute.xlu0 %427
        %v429 = vlaneseq
        %v430 = vshrl.u32 %v429, 7
        %v431 = vadd.s32 %v430, 8
        %432 = vset.pattern.permute.xlu0 %v431
        %433 = vperm.xlu0 %432, %v422
        %v434 = vpop.permute.xlu0 %433
        %v435 = vperm.slane %v143, 6
        %v436 = vlaneseq
        %v437 = vshrl.u32 %v436, 7
        %439 = vset.pattern.permute.xlu0 %v437
        %440 = vperm.xlu0 %439, %v435
        %v441 = vpop.permute.xlu0 %440
        %v442 = vlaneseq
        %v443 = vshrl.u32 %v442, 7
        %v444 = vadd.s32 %v443, 8
        %445 = vset.pattern.permute.xlu0 %v444
        %446 = vperm.xlu0 %445, %v435
        %v447 = vpop.permute.xlu0 %446
        %v448 = vperm.slane %v143, 7
        %v449 = vlaneseq
        %v450 = vshrl.u32 %v449, 7
        %452 = vset.pattern.permute.xlu0 %v450
        %453 = vperm.xlu0 %452, %v448
        %v454 = vpop.permute.xlu0 %453
        %v455 = vlaneseq
        %v456 = vshrl.u32 %v455, 7
        %v457 = vadd.s32 %v456, 8
        %458 = vset.pattern.permute.xlu0 %v457
        %459 = vperm.xlu0 %458, %v448
        %v460 = vpop.permute.xlu0 %459
        %v461 = vperm.slane %v144, 0
        %v462 = vlaneseq
        %v463 = vshrl.u32 %v462, 7
        %465 = vset.pattern.permute.xlu0 %v463
        %466 = vperm.xlu0 %465, %v461
        %v467 = vpop.permute.xlu0 %466
        %v468 = vlaneseq
        %v469 = vshrl.u32 %v468, 7
        %v470 = vadd.s32 %v469, 8
        %471 = vset.pattern.permute.xlu0 %v470
        %472 = vperm.xlu0 %471, %v461
        %v473 = vpop.permute.xlu0 %472
        %v474 = vperm.slane %v144, 1
        %v475 = vlaneseq
        %v476 = vshrl.u32 %v475, 7
        %478 = vset.pattern.permute.xlu0 %v476
        %479 = vperm.xlu0 %478, %v474
        %v480 = vpop.permute.xlu0 %479
        %v481 = vlaneseq
        %v482 = vshrl.u32 %v481, 7
        %v483 = vadd.s32 %v482, 8
        %484 = vset.pattern.permute.xlu0 %v483
        %485 = vperm.xlu0 %484, %v474
        %v486 = vpop.permute.xlu0 %485
        %v487 = vperm.slane %v144, 2
        %v488 = vlaneseq
        %v489 = vshrl.u32 %v488, 7
        %491 = vset.pattern.permute.xlu0 %v489
        %492 = vperm.xlu0 %491, %v487
        %v493 = vpop.permute.xlu0 %492
        %v494 = vlaneseq
        %v495 = vshrl.u32 %v494, 7
        %v496 = vadd.s32 %v495, 8
        %497 = vset.pattern.permute.xlu0 %v496
        %498 = vperm.xlu0 %497, %v487
        %v499 = vpop.permute.xlu0 %498
        %v500 = vperm.slane %v144, 3
        %v501 = vlaneseq
        %v502 = vshrl.u32 %v501, 7
        %504 = vset.pattern.permute.xlu0 %v502
        %505 = vperm.xlu0 %504, %v500
        %v506 = vpop.permute.xlu0 %505
        %v507 = vlaneseq
        %v508 = vshrl.u32 %v507, 7
        %v509 = vadd.s32 %v508, 8
        %510 = vset.pattern.permute.xlu0 %v509
        %511 = vperm.xlu0 %510, %v500
        %v512 = vpop.permute.xlu0 %511
        %v513 = vperm.slane %v144, 4
        %v514 = vlaneseq
        %v515 = vshrl.u32 %v514, 7
        %517 = vset.pattern.permute.xlu0 %v515
        %518 = vperm.xlu0 %517, %v513
        %v519 = vpop.permute.xlu0 %518
        %v520 = vlaneseq
        %v521 = vshrl.u32 %v520, 7
        %v522 = vadd.s32 %v521, 8
        %523 = vset.pattern.permute.xlu0 %v522
        %524 = vperm.xlu0 %523, %v513
        %v525 = vpop.permute.xlu0 %524
        %v526 = vperm.slane %v144, 5
        %v527 = vlaneseq
        %v528 = vshrl.u32 %v527, 7
        %530 = vset.pattern.permute.xlu0 %v528
        %531 = vperm.xlu0 %530, %v526
        %v532 = vpop.permute.xlu0 %531
        %v533 = vlaneseq
        %v534 = vshrl.u32 %v533, 7
        %v535 = vadd.s32 %v534, 8
        %536 = vset.pattern.permute.xlu0 %v535
        %537 = vperm.xlu0 %536, %v526
        %v538 = vpop.permute.xlu0 %537
        %v539 = vperm.slane %v144, 6
        %v540 = vlaneseq
        %v541 = vshrl.u32 %v540, 7
        %543 = vset.pattern.permute.xlu0 %v541
        %544 = vperm.xlu0 %543, %v539
        %v545 = vpop.permute.xlu0 %544
        %v546 = vlaneseq
        %v547 = vshrl.u32 %v546, 7
        %v548 = vadd.s32 %v547, 8
        %549 = vset.pattern.permute.xlu0 %v548
        %550 = vperm.xlu0 %549, %v539
        %v551 = vpop.permute.xlu0 %550
        %v552 = vperm.slane %v144, 7
        %v553 = vlaneseq
        %v554 = vshrl.u32 %v553, 7
        %556 = vset.pattern.permute.xlu0 %v554
        %557 = vperm.xlu0 %556, %v552
        %v558 = vpop.permute.xlu0 %557
        %v559 = vlaneseq
        %v560 = vshrl.u32 %v559, 7
        %v561 = vadd.s32 %v560, 8
        %562 = vset.pattern.permute.xlu0 %v561
        %563 = vperm.xlu0 %562, %v552
        %v564 = vpop.permute.xlu0 %563
        %v565 = vperm.slane %v145, 0
        %v566 = vlaneseq
        %v567 = vshrl.u32 %v566, 7
        %569 = vset.pattern.permute.xlu0 %v567
        %570 = vperm.xlu0 %569, %v565
        %v571 = vpop.permute.xlu0 %570
        %v572 = vlaneseq
        %v573 = vshrl.u32 %v572, 7
        %v574 = vadd.s32 %v573, 8
        %575 = vset.pattern.permute.xlu0 %v574
        %576 = vperm.xlu0 %575, %v565
        %v577 = vpop.permute.xlu0 %576
        %v578 = vperm.slane %v145, 1
        %v579 = vlaneseq
        %v580 = vshrl.u32 %v579, 7
        %582 = vset.pattern.permute.xlu0 %v580
        %583 = vperm.xlu0 %582, %v578
        %v584 = vpop.permute.xlu0 %583
        %v585 = vlaneseq
        %v586 = vshrl.u32 %v585, 7
        %v587 = vadd.s32 %v586, 8
        %588 = vset.pattern.permute.xlu0 %v587
        %589 = vperm.xlu0 %588, %v578
        %v590 = vpop.permute.xlu0 %589
        %v591 = vperm.slane %v145, 2
        %v592 = vlaneseq
        %v593 = vshrl.u32 %v592, 7
        %595 = vset.pattern.permute.xlu0 %v593
        %596 = vperm.xlu0 %595, %v591
        %v597 = vpop.permute.xlu0 %596
        %v598 = vlaneseq
        %v599 = vshrl.u32 %v598, 7
        %v600 = vadd.s32 %v599, 8
        %601 = vset.pattern.permute.xlu0 %v600
        %602 = vperm.xlu0 %601, %v591
        %v603 = vpop.permute.xlu0 %602
        %v604 = vperm.slane %v145, 3
        %v605 = vlaneseq
        %v606 = vshrl.u32 %v605, 7
        %608 = vset.pattern.permute.xlu0 %v606
        %609 = vperm.xlu0 %608, %v604
        %v610 = vpop.permute.xlu0 %609
        %v611 = vlaneseq
        %v612 = vshrl.u32 %v611, 7
        %v613 = vadd.s32 %v612, 8
        %614 = vset.pattern.permute.xlu0 %v613
        %615 = vperm.xlu0 %614, %v604
        %v616 = vpop.permute.xlu0 %615
        %v617 = vperm.slane %v145, 4
        %v618 = vlaneseq
        %v619 = vshrl.u32 %v618, 7
        %621 = vset.pattern.permute.xlu0 %v619
        %622 = vperm.xlu0 %621, %v617
        %v623 = vpop.permute.xlu0 %622
        %v624 = vlaneseq
        %v625 = vshrl.u32 %v624, 7
        %v626 = vadd.s32 %v625, 8
        %627 = vset.pattern.permute.xlu0 %v626
        %628 = vperm.xlu0 %627, %v617
        %v629 = vpop.permute.xlu0 %628
        %v630 = vperm.slane %v145, 5
        %v631 = vlaneseq
        %v632 = vshrl.u32 %v631, 7
        %634 = vset.pattern.permute.xlu0 %v632
        %635 = vperm.xlu0 %634, %v630
        %v636 = vpop.permute.xlu0 %635
        %v637 = vlaneseq
        %v638 = vshrl.u32 %v637, 7
        %v639 = vadd.s32 %v638, 8
        %640 = vset.pattern.permute.xlu0 %v639
        %641 = vperm.xlu0 %640, %v630
        %v642 = vpop.permute.xlu0 %641
        %v643 = vperm.slane %v145, 6
        %v644 = vlaneseq
        %v645 = vshrl.u32 %v644, 7
        %647 = vset.pattern.permute.xlu0 %v645
        %648 = vperm.xlu0 %647, %v643
        %v649 = vpop.permute.xlu0 %648
        %v650 = vlaneseq
        %v651 = vshrl.u32 %v650, 7
        %v652 = vadd.s32 %v651, 8
        %653 = vset.pattern.permute.xlu0 %v652
        %654 = vperm.xlu0 %653, %v643
        %v655 = vpop.permute.xlu0 %654
        %v656 = vperm.slane %v145, 7
        %v657 = vlaneseq
        %v658 = vshrl.u32 %v657, 7
        %660 = vset.pattern.permute.xlu0 %v658
        %661 = vperm.xlu0 %660, %v656
        %v662 = vpop.permute.xlu0 %661
        %v663 = vlaneseq
        %v664 = vshrl.u32 %v663, 7
        %v665 = vadd.s32 %v664, 8
        %666 = vset.pattern.permute.xlu0 %v665
        %667 = vperm.xlu0 %666, %v656
        %v668 = vpop.permute.xlu0 %667
        %v669 = vperm.slane %v146, 0
        %v670 = vlaneseq
        %v671 = vshrl.u32 %v670, 7
        %673 = vset.pattern.permute.xlu0 %v671
        %674 = vperm.xlu0 %673, %v669
        %v675 = vpop.permute.xlu0 %674
        %v676 = vlaneseq
        %v677 = vshrl.u32 %v676, 7
        %v678 = vadd.s32 %v677, 8
        %679 = vset.pattern.permute.xlu0 %v678
        %680 = vperm.xlu0 %679, %v669
        %v681 = vpop.permute.xlu0 %680
        %v682 = vperm.slane %v146, 1
        %v683 = vlaneseq
        %v684 = vshrl.u32 %v683, 7
        %686 = vset.pattern.permute.xlu0 %v684
        %687 = vperm.xlu0 %686, %v682
        %v688 = vpop.permute.xlu0 %687
        %v689 = vlaneseq
        %v690 = vshrl.u32 %v689, 7
        %v691 = vadd.s32 %v690, 8
        %692 = vset.pattern.permute.xlu0 %v691
        %693 = vperm.xlu0 %692, %v682
        %v694 = vpop.permute.xlu0 %693
        %v695 = vperm.slane %v146, 2
        %v696 = vlaneseq
        %v697 = vshrl.u32 %v696, 7
        %699 = vset.pattern.permute.xlu0 %v697
        %700 = vperm.xlu0 %699, %v695
        %v701 = vpop.permute.xlu0 %700
        %v702 = vlaneseq
        %v703 = vshrl.u32 %v702, 7
        %v704 = vadd.s32 %v703, 8
        %705 = vset.pattern.permute.xlu0 %v704
        %706 = vperm.xlu0 %705, %v695
        %v707 = vpop.permute.xlu0 %706
        %v708 = vperm.slane %v146, 3
        %v709 = vlaneseq
        %v710 = vshrl.u32 %v709, 7
        %712 = vset.pattern.permute.xlu0 %v710
        %713 = vperm.xlu0 %712, %v708
        %v714 = vpop.permute.xlu0 %713
        %v715 = vlaneseq
        %v716 = vshrl.u32 %v715, 7
        %v717 = vadd.s32 %v716, 8
        %718 = vset.pattern.permute.xlu0 %v717
        %719 = vperm.xlu0 %718, %v708
        %v720 = vpop.permute.xlu0 %719
        %v721 = vperm.slane %v146, 4
        %v722 = vlaneseq
        %v723 = vshrl.u32 %v722, 7
        %725 = vset.pattern.permute.xlu0 %v723
        %726 = vperm.xlu0 %725, %v721
        %v727 = vpop.permute.xlu0 %726
        %v728 = vlaneseq
        %v729 = vshrl.u32 %v728, 7
        %v730 = vadd.s32 %v729, 8
        %731 = vset.pattern.permute.xlu0 %v730
        %732 = vperm.xlu0 %731, %v721
        %v733 = vpop.permute.xlu0 %732
        %v734 = vperm.slane %v146, 5
        %v735 = vlaneseq
        %v736 = vshrl.u32 %v735, 7
        %738 = vset.pattern.permute.xlu0 %v736
        %739 = vperm.xlu0 %738, %v734
        %v740 = vpop.permute.xlu0 %739
        %v741 = vlaneseq
        %v742 = vshrl.u32 %v741, 7
        %v743 = vadd.s32 %v742, 8
        %744 = vset.pattern.permute.xlu0 %v743
        %745 = vperm.xlu0 %744, %v734
        %v746 = vpop.permute.xlu0 %745
        %v747 = vperm.slane %v146, 6
        %v748 = vlaneseq
        %v749 = vshrl.u32 %v748, 7
        %751 = vset.pattern.permute.xlu0 %v749
        %752 = vperm.xlu0 %751, %v747
        %v753 = vpop.permute.xlu0 %752
        %v754 = vlaneseq
        %v755 = vshrl.u32 %v754, 7
        %v756 = vadd.s32 %v755, 8
        %757 = vset.pattern.permute.xlu0 %v756
        %758 = vperm.xlu0 %757, %v747
        %v759 = vpop.permute.xlu0 %758
        %v760 = vperm.slane %v146, 7
        %v761 = vlaneseq
        %v762 = vshrl.u32 %v761, 7
        %764 = vset.pattern.permute.xlu0 %v762
        %765 = vperm.xlu0 %764, %v760
        %v766 = vpop.permute.xlu0 %765
        %v767 = vlaneseq
        %v768 = vshrl.u32 %v767, 7
        %v769 = vadd.s32 %v768, 8
        %770 = vset.pattern.permute.xlu0 %v769
        %771 = vperm.xlu0 %770, %v760
        %v772 = vpop.permute.xlu0 %771
        %v773 = vperm.slane %v147, 0
        %v774 = vlaneseq
        %v775 = vshrl.u32 %v774, 7
        %777 = vset.pattern.permute.xlu0 %v775
        %778 = vperm.xlu0 %777, %v773
        %v779 = vpop.permute.xlu0 %778
        %v780 = vlaneseq
        %v781 = vshrl.u32 %v780, 7
        %v782 = vadd.s32 %v781, 8
        %783 = vset.pattern.permute.xlu0 %v782
        %784 = vperm.xlu0 %783, %v773
        %v785 = vpop.permute.xlu0 %784
        %v786 = vperm.slane %v147, 1
        %v787 = vlaneseq
        %v788 = vshrl.u32 %v787, 7
        %790 = vset.pattern.permute.xlu0 %v788
        %791 = vperm.xlu0 %790, %v786
        %v792 = vpop.permute.xlu0 %791
        %v793 = vlaneseq
        %v794 = vshrl.u32 %v793, 7
        %v795 = vadd.s32 %v794, 8
        %796 = vset.pattern.permute.xlu0 %v795
        %797 = vperm.xlu0 %796, %v786
        %v798 = vpop.permute.xlu0 %797
        %v799 = vperm.slane %v147, 2
        %v800 = vlaneseq
        %v801 = vshrl.u32 %v800, 7
        %803 = vset.pattern.permute.xlu0 %v801
        %804 = vperm.xlu0 %803, %v799
        %v805 = vpop.permute.xlu0 %804
        %v806 = vlaneseq
        %v807 = vshrl.u32 %v806, 7
        %v808 = vadd.s32 %v807, 8
        %809 = vset.pattern.permute.xlu0 %v808
        %810 = vperm.xlu0 %809, %v799
        %v811 = vpop.permute.xlu0 %810
        %v812 = vperm.slane %v147, 3
        %v813 = vlaneseq
        %v814 = vshrl.u32 %v813, 7
        %816 = vset.pattern.permute.xlu0 %v814
        %817 = vperm.xlu0 %816, %v812
        %v818 = vpop.permute.xlu0 %817
        %v819 = vlaneseq
        %v820 = vshrl.u32 %v819, 7
        %v821 = vadd.s32 %v820, 8
        %822 = vset.pattern.permute.xlu0 %v821
        %823 = vperm.xlu0 %822, %v812
        %v824 = vpop.permute.xlu0 %823
        %v825 = vperm.slane %v147, 4
        %v826 = vlaneseq
        %v827 = vshrl.u32 %v826, 7
        %829 = vset.pattern.permute.xlu0 %v827
        %830 = vperm.xlu0 %829, %v825
        %v831 = vpop.permute.xlu0 %830
        %v832 = vlaneseq
        %v833 = vshrl.u32 %v832, 7
        %v834 = vadd.s32 %v833, 8
        %835 = vset.pattern.permute.xlu0 %v834
        %836 = vperm.xlu0 %835, %v825
        %v837 = vpop.permute.xlu0 %836
        %v838 = vperm.slane %v147, 5
        %v839 = vlaneseq
        %v840 = vshrl.u32 %v839, 7
        %842 = vset.pattern.permute.xlu0 %v840
        %843 = vperm.xlu0 %842, %v838
        %v844 = vpop.permute.xlu0 %843
        %v845 = vlaneseq
        %v846 = vshrl.u32 %v845, 7
        %v847 = vadd.s32 %v846, 8
        %848 = vset.pattern.permute.xlu0 %v847
        %849 = vperm.xlu0 %848, %v838
        %v850 = vpop.permute.xlu0 %849
        %v851 = vperm.slane %v147, 6
        %v852 = vlaneseq
        %v853 = vshrl.u32 %v852, 7
        %855 = vset.pattern.permute.xlu0 %v853
        %856 = vperm.xlu0 %855, %v851
        %v857 = vpop.permute.xlu0 %856
        %v858 = vlaneseq
        %v859 = vshrl.u32 %v858, 7
        %v860 = vadd.s32 %v859, 8
        %861 = vset.pattern.permute.xlu0 %v860
        %862 = vperm.xlu0 %861, %v851
        %v863 = vpop.permute.xlu0 %862
        %v864 = vperm.slane %v147, 7
        %v865 = vlaneseq
        %v866 = vshrl.u32 %v865, 7
        %868 = vset.pattern.permute.xlu0 %v866
        %869 = vperm.xlu0 %868, %v864
        %v870 = vpop.permute.xlu0 %869
        %v871 = vlaneseq
        %v872 = vshrl.u32 %v871, 7
        %v873 = vadd.s32 %v872, 8
        %874 = vset.pattern.permute.xlu0 %v873
        %875 = vperm.xlu0 %874, %v864
        %v876 = vpop.permute.xlu0 %875
        %v877 = vperm.slane %v148, 0
        %v878 = vlaneseq
        %v879 = vshrl.u32 %v878, 7
        %881 = vset.pattern.permute.xlu0 %v879
        %882 = vperm.xlu0 %881, %v877
        %v883 = vpop.permute.xlu0 %882
        %v884 = vlaneseq
        %v885 = vshrl.u32 %v884, 7
        %v886 = vadd.s32 %v885, 8
        %887 = vset.pattern.permute.xlu0 %v886
        %888 = vperm.xlu0 %887, %v877
        %v889 = vpop.permute.xlu0 %888
        %v890 = vperm.slane %v148, 1
        %v891 = vlaneseq
        %v892 = vshrl.u32 %v891, 7
        %894 = vset.pattern.permute.xlu0 %v892
        %895 = vperm.xlu0 %894, %v890
        %v896 = vpop.permute.xlu0 %895
        %v897 = vlaneseq
        %v898 = vshrl.u32 %v897, 7
        %v899 = vadd.s32 %v898, 8
        %900 = vset.pattern.permute.xlu0 %v899
        %901 = vperm.xlu0 %900, %v890
        %v902 = vpop.permute.xlu0 %901
        %v903 = vperm.slane %v148, 2
        %v904 = vlaneseq
        %v905 = vshrl.u32 %v904, 7
        %907 = vset.pattern.permute.xlu0 %v905
        %908 = vperm.xlu0 %907, %v903
        %v909 = vpop.permute.xlu0 %908
        %v910 = vlaneseq
        %v911 = vshrl.u32 %v910, 7
        %v912 = vadd.s32 %v911, 8
        %913 = vset.pattern.permute.xlu0 %v912
        %914 = vperm.xlu0 %913, %v903
        %v915 = vpop.permute.xlu0 %914
        %v916 = vperm.slane %v148, 3
        %v917 = vlaneseq
        %v918 = vshrl.u32 %v917, 7
        %920 = vset.pattern.permute.xlu0 %v918
        %921 = vperm.xlu0 %920, %v916
        %v922 = vpop.permute.xlu0 %921
        %v923 = vlaneseq
        %v924 = vshrl.u32 %v923, 7
        %v925 = vadd.s32 %v924, 8
        %926 = vset.pattern.permute.xlu0 %v925
        %927 = vperm.xlu0 %926, %v916
        %v928 = vpop.permute.xlu0 %927
        %v929 = vperm.slane %v148, 4
        %v930 = vlaneseq
        %v931 = vshrl.u32 %v930, 7
        %933 = vset.pattern.permute.xlu0 %v931
        %934 = vperm.xlu0 %933, %v929
        %v935 = vpop.permute.xlu0 %934
        %v936 = vlaneseq
        %v937 = vshrl.u32 %v936, 7
        %v938 = vadd.s32 %v937, 8
        %939 = vset.pattern.permute.xlu0 %v938
        %940 = vperm.xlu0 %939, %v929
        %v941 = vpop.permute.xlu0 %940
        %v942 = vperm.slane %v148, 5
        %v943 = vlaneseq
        %v944 = vshrl.u32 %v943, 7
        %946 = vset.pattern.permute.xlu0 %v944
        %947 = vperm.xlu0 %946, %v942
        %v948 = vpop.permute.xlu0 %947
        %v949 = vlaneseq
        %v950 = vshrl.u32 %v949, 7
        %v951 = vadd.s32 %v950, 8
        %952 = vset.pattern.permute.xlu0 %v951
        %953 = vperm.xlu0 %952, %v942
        %v954 = vpop.permute.xlu0 %953
        %v955 = vperm.slane %v148, 6
        %v956 = vlaneseq
        %v957 = vshrl.u32 %v956, 7
        %959 = vset.pattern.permute.xlu0 %v957
        %960 = vperm.xlu0 %959, %v955
        %v961 = vpop.permute.xlu0 %960
        %v962 = vlaneseq
        %v963 = vshrl.u32 %v962, 7
        %v964 = vadd.s32 %v963, 8
        %965 = vset.pattern.permute.xlu0 %v964
        %966 = vperm.xlu0 %965, %v955
        %v967 = vpop.permute.xlu0 %966
        %v968 = vperm.slane %v148, 7
        %v969 = vlaneseq
        %v970 = vshrl.u32 %v969, 7
        %972 = vset.pattern.permute.xlu0 %v970
        %973 = vperm.xlu0 %972, %v968
        %v974 = vpop.permute.xlu0 %973
        %v975 = vlaneseq
        %v976 = vshrl.u32 %v975, 7
        %v977 = vadd.s32 %v976, 8
        %978 = vset.pattern.permute.xlu0 %v977
        %979 = vperm.xlu0 %978, %v968
        %v980 = vpop.permute.xlu0 %979
        %v981 = vrot.slane %v181, 4
        %vm982 = vcmask 1047556
        %v983 = vsel %vm982, %v981, %v155
        %v984 = vrot.slane %v155, 4
        %v985 = vsel %vm982, %v181, %v984
        %v987 = vunpack.c.l.s4 1983009808
        %v988 = vunpack.c.0.s8 %v987
        %v989 = vperm.slane %v983, %v988
        %v991 = vunpack.c.l.s4 1983009808
        %v992 = vunpack.c.0.s8 %v991
        %v993 = vperm.slane %v985, %v992
        %v994 = vrot.slane %v194, 4
        %v995 = vsel %vm982, %v994, %v168
        %v996 = vrot.slane %v168, 4
        %v997 = vsel %vm982, %v194, %v996
        %v999 = vunpack.c.l.s4 1983009808
        %v1000 = vunpack.c.0.s8 %v999
        %v1001 = vperm.slane %v995, %v1000
        %v1003 = vunpack.c.l.s4 1983009808
        %v1004 = vunpack.c.0.s8 %v1003
        %v1005 = vperm.slane %v997, %v1004
        %v1006 = vrot.slane %v233, 4
        %v1007 = vsel %vm982, %v1006, %v207
        %v1008 = vrot.slane %v207, 4
        %v1009 = vsel %vm982, %v233, %v1008
        %v1011 = vunpack.c.l.s4 1983009808
        %v1012 = vunpack.c.0.s8 %v1011
        %v1013 = vperm.slane %v1007, %v1012
        %v1015 = vunpack.c.l.s4 1983009808
        %v1016 = vunpack.c.0.s8 %v1015
        %v1017 = vperm.slane %v1009, %v1016
        %v1018 = vrot.slane %v246, 4
        %v1019 = vsel %vm982, %v1018, %v220
        %v1020 = vrot.slane %v220, 4
        %v1021 = vsel %vm982, %v246, %v1020
        %v1023 = vunpack.c.l.s4 1983009808
        %v1024 = vunpack.c.0.s8 %v1023
        %v1025 = vperm.slane %v1019, %v1024
        %v1027 = vunpack.c.l.s4 1983009808
        %v1028 = vunpack.c.0.s8 %v1027
        %v1029 = vperm.slane %v1021, %v1028
        %v1030 = vrot.slane %v1001, 4
        %v1031 = vsel %vm982, %v1030, %v989
        %v1032 = vrot.slane %v989, 4
        %v1033 = vsel %vm982, %v1001, %v1032
        %v1035 = vunpack.c.l.s4 1934713408
        %v1036 = vunpack.c.0.s8 %v1035
        %v1037 = vperm.slane %v1031, %v1036
        %v1039 = vunpack.c.l.s4 1934713408
        %v1040 = vunpack.c.0.s8 %v1039
        %v1041 = vperm.slane %v1033, %v1040
        %v1042 = vrot.slane %v1005, 4
        %v1043 = vsel %vm982, %v1042, %v993
        %v1044 = vrot.slane %v993, 4
        %v1045 = vsel %vm982, %v1005, %v1044
        %v1047 = vunpack.c.l.s4 1934713408
        %v1048 = vunpack.c.0.s8 %v1047
        %v1049 = vperm.slane %v1043, %v1048
        %v1051 = vunpack.c.l.s4 1934713408
        %v1052 = vunpack.c.0.s8 %v1051
        %v1053 = vperm.slane %v1045, %v1052
        %v1054 = vrot.slane %v1025, 4
        %v1055 = vsel %vm982, %v1054, %v1013
        %v1056 = vrot.slane %v1013, 4
        %v1057 = vsel %vm982, %v1025, %v1056
        %v1059 = vunpack.c.l.s4 1934713408
        %v1060 = vunpack.c.0.s8 %v1059
        %v1061 = vperm.slane %v1055, %v1060
        %v1063 = vunpack.c.l.s4 1934713408
        %v1064 = vunpack.c.0.s8 %v1063
        %v1065 = vperm.slane %v1057, %v1064
        %v1066 = vrot.slane %v1029, 4
        %v1067 = vsel %vm982, %v1066, %v1017
        %v1068 = vrot.slane %v1017, 4
        %v1069 = vsel %vm982, %v1029, %v1068
        %v1071 = vunpack.c.l.s4 1934713408
        %v1072 = vunpack.c.0.s8 %v1071
        %v1073 = vperm.slane %v1067, %v1072
        %v1075 = vunpack.c.l.s4 1934713408
        %v1076 = vunpack.c.0.s8 %v1075
        %v1077 = vperm.slane %v1069, %v1076
        %v1078 = vrot.slane %v1061, 4
        %v1079 = vsel %vm982, %v1078, %v1037
        %v1080 = vrot.slane %v1037, 4
        %v1081 = vsel %vm982, %v1061, %v1080
        %v1082 = vrot.slane %v1065, 4
        %v1083 = vsel %vm982, %v1082, %v1041
        %v1084 = vrot.slane %v1041, 4
        %v1085 = vsel %vm982, %v1065, %v1084
        %v1086 = vrot.slane %v1073, 4
        %v1087 = vsel %vm982, %v1086, %v1049
        %v1088 = vrot.slane %v1049, 4
        %v1089 = vsel %vm982, %v1073, %v1088
        %v1090 = vrot.slane %v1077, 4
        %v1091 = vsel %vm982, %v1090, %v1053
        %v1092 = vrot.slane %v1053, 4
        %v1093 = vsel %vm982, %v1077, %v1092
        %v1094 = vrot.slane %v285, 4
        %v1095 = vsel %vm982, %v1094, %v259
        %v1096 = vrot.slane %v259, 4
        %v1097 = vsel %vm982, %v285, %v1096
        %v1099 = vunpack.c.l.s4 1983009808
        %v1100 = vunpack.c.0.s8 %v1099
        %v1101 = vperm.slane %v1095, %v1100
        %v1103 = vunpack.c.l.s4 1983009808
        %v1104 = vunpack.c.0.s8 %v1103
        %v1105 = vperm.slane %v1097, %v1104
        %v1106 = vrot.slane %v298, 4
        %v1107 = vsel %vm982, %v1106, %v272
        %v1108 = vrot.slane %v272, 4
        %v1109 = vsel %vm982, %v298, %v1108
        %v1111 = vunpack.c.l.s4 1983009808
        %v1112 = vunpack.c.0.s8 %v1111
        %v1113 = vperm.slane %v1107, %v1112
        %v1115 = vunpack.c.l.s4 1983009808
        %v1116 = vunpack.c.0.s8 %v1115
        %v1117 = vperm.slane %v1109, %v1116
        %v1118 = vrot.slane %v337, 4
        %v1119 = vsel %vm982, %v1118, %v311
        %v1120 = vrot.slane %v311, 4
        %v1121 = vsel %vm982, %v337, %v1120
        %v1123 = vunpack.c.l.s4 1983009808
        %v1124 = vunpack.c.0.s8 %v1123
        %v1125 = vperm.slane %v1119, %v1124
        %v1127 = vunpack.c.l.s4 1983009808
        %v1128 = vunpack.c.0.s8 %v1127
        %v1129 = vperm.slane %v1121, %v1128
        %v1130 = vrot.slane %v350, 4
        %v1131 = vsel %vm982, %v1130, %v324
        %v1132 = vrot.slane %v324, 4
        %v1133 = vsel %vm982, %v350, %v1132
        %v1135 = vunpack.c.l.s4 1983009808
        %v1136 = vunpack.c.0.s8 %v1135
        %v1137 = vperm.slane %v1131, %v1136
        %v1139 = vunpack.c.l.s4 1983009808
        %v1140 = vunpack.c.0.s8 %v1139
        %v1141 = vperm.slane %v1133, %v1140
        %v1142 = vrot.slane %v1113, 4
        %v1143 = vsel %vm982, %v1142, %v1101
        %v1144 = vrot.slane %v1101, 4
        %v1145 = vsel %vm982, %v1113, %v1144
        %v1147 = vunpack.c.l.s4 1934713408
        %v1148 = vunpack.c.0.s8 %v1147
        %v1149 = vperm.slane %v1143, %v1148
        %v1151 = vunpack.c.l.s4 1934713408
        %v1152 = vunpack.c.0.s8 %v1151
        %v1153 = vperm.slane %v1145, %v1152
        %v1154 = vrot.slane %v1117, 4
        %v1155 = vsel %vm982, %v1154, %v1105
        %v1156 = vrot.slane %v1105, 4
        %v1157 = vsel %vm982, %v1117, %v1156
        %v1159 = vunpack.c.l.s4 1934713408
        %v1160 = vunpack.c.0.s8 %v1159
        %v1161 = vperm.slane %v1155, %v1160
        %v1163 = vunpack.c.l.s4 1934713408
        %v1164 = vunpack.c.0.s8 %v1163
        %v1165 = vperm.slane %v1157, %v1164
        %v1166 = vrot.slane %v1137, 4
        %v1167 = vsel %vm982, %v1166, %v1125
        %v1168 = vrot.slane %v1125, 4
        %v1169 = vsel %vm982, %v1137, %v1168
        %v1171 = vunpack.c.l.s4 1934713408
        %v1172 = vunpack.c.0.s8 %v1171
        %v1173 = vperm.slane %v1167, %v1172
        %v1175 = vunpack.c.l.s4 1934713408
        %v1176 = vunpack.c.0.s8 %v1175
        %v1177 = vperm.slane %v1169, %v1176
        %v1178 = vrot.slane %v1141, 4
        %v1179 = vsel %vm982, %v1178, %v1129
        %v1180 = vrot.slane %v1129, 4
        %v1181 = vsel %vm982, %v1141, %v1180
        %v1183 = vunpack.c.l.s4 1934713408
        %v1184 = vunpack.c.0.s8 %v1183
        %v1185 = vperm.slane %v1179, %v1184
        %v1187 = vunpack.c.l.s4 1934713408
        %v1188 = vunpack.c.0.s8 %v1187
        %v1189 = vperm.slane %v1181, %v1188
        %v1190 = vrot.slane %v1173, 4
        %v1191 = vsel %vm982, %v1190, %v1149
        %v1192 = vrot.slane %v1149, 4
        %v1193 = vsel %vm982, %v1173, %v1192
        %v1194 = vrot.slane %v1177, 4
        %v1195 = vsel %vm982, %v1194, %v1153
        %v1196 = vrot.slane %v1153, 4
        %v1197 = vsel %vm982, %v1177, %v1196
        %v1198 = vrot.slane %v1185, 4
        %v1199 = vsel %vm982, %v1198, %v1161
        %v1200 = vrot.slane %v1161, 4
        %v1201 = vsel %vm982, %v1185, %v1200
        %v1202 = vrot.slane %v1189, 4
        %v1203 = vsel %vm982, %v1202, %v1165
        %v1204 = vrot.slane %v1165, 4
        %v1205 = vsel %vm982, %v1189, %v1204
        %v1206 = vrot.slane %v389, 4
        %v1207 = vsel %vm982, %v1206, %v363
        %v1208 = vrot.slane %v363, 4
        %v1209 = vsel %vm982, %v389, %v1208
        %v1211 = vunpack.c.l.s4 1983009808
        %v1212 = vunpack.c.0.s8 %v1211
        %v1213 = vperm.slane %v1207, %v1212
        %v1215 = vunpack.c.l.s4 1983009808
        %v1216 = vunpack.c.0.s8 %v1215
        %v1217 = vperm.slane %v1209, %v1216
        %v1218 = vrot.slane %v402, 4
        %v1219 = vsel %vm982, %v1218, %v376
        %v1220 = vrot.slane %v376, 4
        %v1221 = vsel %vm982, %v402, %v1220
        %v1223 = vunpack.c.l.s4 1983009808
        %v1224 = vunpack.c.0.s8 %v1223
        %v1225 = vperm.slane %v1219, %v1224
        %v1227 = vunpack.c.l.s4 1983009808
        %v1228 = vunpack.c.0.s8 %v1227
        %v1229 = vperm.slane %v1221, %v1228
        %v1230 = vrot.slane %v441, 4
        %v1231 = vsel %vm982, %v1230, %v415
        %v1232 = vrot.slane %v415, 4
        %v1233 = vsel %vm982, %v441, %v1232
        %v1235 = vunpack.c.l.s4 1983009808
        %v1236 = vunpack.c.0.s8 %v1235
        %v1237 = vperm.slane %v1231, %v1236
        %v1239 = vunpack.c.l.s4 1983009808
        %v1240 = vunpack.c.0.s8 %v1239
        %v1241 = vperm.slane %v1233, %v1240
        %v1242 = vrot.slane %v454, 4
        %v1243 = vsel %vm982, %v1242, %v428
        %v1244 = vrot.slane %v428, 4
        %v1245 = vsel %vm982, %v454, %v1244
        %v1247 = vunpack.c.l.s4 1983009808
        %v1248 = vunpack.c.0.s8 %v1247
        %v1249 = vperm.slane %v1243, %v1248
        %v1251 = vunpack.c.l.s4 1983009808
        %v1252 = vunpack.c.0.s8 %v1251
        %v1253 = vperm.slane %v1245, %v1252
        %v1254 = vrot.slane %v1225, 4
        %v1255 = vsel %vm982, %v1254, %v1213
        %v1256 = vrot.slane %v1213, 4
        %v1257 = vsel %vm982, %v1225, %v1256
        %v1259 = vunpack.c.l.s4 1934713408
        %v1260 = vunpack.c.0.s8 %v1259
        %v1261 = vperm.slane %v1255, %v1260
        %v1263 = vunpack.c.l.s4 1934713408
        %v1264 = vunpack.c.0.s8 %v1263
        %v1265 = vperm.slane %v1257, %v1264
        %v1266 = vrot.slane %v1229, 4
        %v1267 = vsel %vm982, %v1266, %v1217
        %v1268 = vrot.slane %v1217, 4
        %v1269 = vsel %vm982, %v1229, %v1268
        %v1271 = vunpack.c.l.s4 1934713408
        %v1272 = vunpack.c.0.s8 %v1271
        %v1273 = vperm.slane %v1267, %v1272
        %v1275 = vunpack.c.l.s4 1934713408
        %v1276 = vunpack.c.0.s8 %v1275
        %v1277 = vperm.slane %v1269, %v1276
        %v1278 = vrot.slane %v1249, 4
        %v1279 = vsel %vm982, %v1278, %v1237
        %v1280 = vrot.slane %v1237, 4
        %v1281 = vsel %vm982, %v1249, %v1280
        %v1283 = vunpack.c.l.s4 1934713408
        %v1284 = vunpack.c.0.s8 %v1283
        %v1285 = vperm.slane %v1279, %v1284
        %v1287 = vunpack.c.l.s4 1934713408
        %v1288 = vunpack.c.0.s8 %v1287
        %v1289 = vperm.slane %v1281, %v1288
        %v1290 = vrot.slane %v1253, 4
        %v1291 = vsel %vm982, %v1290, %v1241
        %v1292 = vrot.slane %v1241, 4
        %v1293 = vsel %vm982, %v1253, %v1292
        %v1295 = vunpack.c.l.s4 1934713408
        %v1296 = vunpack.c.0.s8 %v1295
        %v1297 = vperm.slane %v1291, %v1296
        %v1299 = vunpack.c.l.s4 1934713408
        %v1300 = vunpack.c.0.s8 %v1299
        %v1301 = vperm.slane %v1293, %v1300
        %v1302 = vrot.slane %v1285, 4
        %v1303 = vsel %vm982, %v1302, %v1261
        %v1304 = vrot.slane %v1261, 4
        %v1305 = vsel %vm982, %v1285, %v1304
        %v1306 = vrot.slane %v1289, 4
        %v1307 = vsel %vm982, %v1306, %v1265
        %v1308 = vrot.slane %v1265, 4
        %v1309 = vsel %vm982, %v1289, %v1308
        %v1310 = vrot.slane %v1297, 4
        %v1311 = vsel %vm982, %v1310, %v1273
        %v1312 = vrot.slane %v1273, 4
        %v1313 = vsel %vm982, %v1297, %v1312
        %v1314 = vrot.slane %v1301, 4
        %v1315 = vsel %vm982, %v1314, %v1277
        %v1316 = vrot.slane %v1277, 4
        %v1317 = vsel %vm982, %v1301, %v1316
        %v1318 = vrot.slane %v493, 4
        %v1319 = vsel %vm982, %v1318, %v467
        %v1320 = vrot.slane %v467, 4
        %v1321 = vsel %vm982, %v493, %v1320
        %v1323 = vunpack.c.l.s4 1983009808
        %v1324 = vunpack.c.0.s8 %v1323
        %v1325 = vperm.slane %v1319, %v1324
        %v1327 = vunpack.c.l.s4 1983009808
        %v1328 = vunpack.c.0.s8 %v1327
        %v1329 = vperm.slane %v1321, %v1328
        %v1330 = vrot.slane %v506, 4
        %v1331 = vsel %vm982, %v1330, %v480
        %v1332 = vrot.slane %v480, 4
        %v1333 = vsel %vm982, %v506, %v1332
        %v1335 = vunpack.c.l.s4 1983009808
        %v1336 = vunpack.c.0.s8 %v1335
        %v1337 = vperm.slane %v1331, %v1336
        %v1339 = vunpack.c.l.s4 1983009808
        %v1340 = vunpack.c.0.s8 %v1339
        %v1341 = vperm.slane %v1333, %v1340
        %v1342 = vrot.slane %v545, 4
        %v1343 = vsel %vm982, %v1342, %v519
        %v1344 = vrot.slane %v519, 4
        %v1345 = vsel %vm982, %v545, %v1344
        %v1347 = vunpack.c.l.s4 1983009808
        %v1348 = vunpack.c.0.s8 %v1347
        %v1349 = vperm.slane %v1343, %v1348
        %v1351 = vunpack.c.l.s4 1983009808
        %v1352 = vunpack.c.0.s8 %v1351
        %v1353 = vperm.slane %v1345, %v1352
        %v1354 = vrot.slane %v558, 4
        %v1355 = vsel %vm982, %v1354, %v532
        %v1356 = vrot.slane %v532, 4
        %v1357 = vsel %vm982, %v558, %v1356
        %v1359 = vunpack.c.l.s4 1983009808
        %v1360 = vunpack.c.0.s8 %v1359
        %v1361 = vperm.slane %v1355, %v1360
        %v1363 = vunpack.c.l.s4 1983009808
        %v1364 = vunpack.c.0.s8 %v1363
        %v1365 = vperm.slane %v1357, %v1364
        %v1366 = vrot.slane %v1337, 4
        %v1367 = vsel %vm982, %v1366, %v1325
        %v1368 = vrot.slane %v1325, 4
        %v1369 = vsel %vm982, %v1337, %v1368
        %v1371 = vunpack.c.l.s4 1934713408
        %v1372 = vunpack.c.0.s8 %v1371
        %v1373 = vperm.slane %v1367, %v1372
        %v1375 = vunpack.c.l.s4 1934713408
        %v1376 = vunpack.c.0.s8 %v1375
        %v1377 = vperm.slane %v1369, %v1376
        %v1378 = vrot.slane %v1341, 4
        %v1379 = vsel %vm982, %v1378, %v1329
        %v1380 = vrot.slane %v1329, 4
        %v1381 = vsel %vm982, %v1341, %v1380
        %v1383 = vunpack.c.l.s4 1934713408
        %v1384 = vunpack.c.0.s8 %v1383
        %v1385 = vperm.slane %v1379, %v1384
        %v1387 = vunpack.c.l.s4 1934713408
        %v1388 = vunpack.c.0.s8 %v1387
        %v1389 = vperm.slane %v1381, %v1388
        %v1390 = vrot.slane %v1361, 4
        %v1391 = vsel %vm982, %v1390, %v1349
        %v1392 = vrot.slane %v1349, 4
        %v1393 = vsel %vm982, %v1361, %v1392
        %v1395 = vunpack.c.l.s4 1934713408
        %v1396 = vunpack.c.0.s8 %v1395
        %v1397 = vperm.slane %v1391, %v1396
        %v1399 = vunpack.c.l.s4 1934713408
        %v1400 = vunpack.c.0.s8 %v1399
        %v1401 = vperm.slane %v1393, %v1400
        %v1402 = vrot.slane %v1365, 4
        %v1403 = vsel %vm982, %v1402, %v1353
        %v1404 = vrot.slane %v1353, 4
        %v1405 = vsel %vm982, %v1365, %v1404
        %v1407 = vunpack.c.l.s4 1934713408
        %v1408 = vunpack.c.0.s8 %v1407
        %v1409 = vperm.slane %v1403, %v1408
        %v1411 = vunpack.c.l.s4 1934713408
        %v1412 = vunpack.c.0.s8 %v1411
        %v1413 = vperm.slane %v1405, %v1412
        %v1414 = vrot.slane %v1397, 4
        %v1415 = vsel %vm982, %v1414, %v1373
        %v1416 = vrot.slane %v1373, 4
        %v1417 = vsel %vm982, %v1397, %v1416
        %v1418 = vrot.slane %v1401, 4
        %v1419 = vsel %vm982, %v1418, %v1377
        %v1420 = vrot.slane %v1377, 4
        %v1421 = vsel %vm982, %v1401, %v1420
        %v1422 = vrot.slane %v1409, 4
        %v1423 = vsel %vm982, %v1422, %v1385
        %v1424 = vrot.slane %v1385, 4
        %v1425 = vsel %vm982, %v1409, %v1424
        %v1426 = vrot.slane %v1413, 4
        %v1427 = vsel %vm982, %v1426, %v1389
        %v1428 = vrot.slane %v1389, 4
        %v1429 = vsel %vm982, %v1413, %v1428
        %v1430 = vrot.slane %v597, 4
        %v1431 = vsel %vm982, %v1430, %v571
        %v1432 = vrot.slane %v571, 4
        %v1433 = vsel %vm982, %v597, %v1432
        %v1435 = vunpack.c.l.s4 1983009808
        %v1436 = vunpack.c.0.s8 %v1435
        %v1437 = vperm.slane %v1431, %v1436
        %v1439 = vunpack.c.l.s4 1983009808
        %v1440 = vunpack.c.0.s8 %v1439
        %v1441 = vperm.slane %v1433, %v1440
        %v1442 = vrot.slane %v610, 4
        %v1443 = vsel %vm982, %v1442, %v584
        %v1444 = vrot.slane %v584, 4
        %v1445 = vsel %vm982, %v610, %v1444
        %v1447 = vunpack.c.l.s4 1983009808
        %v1448 = vunpack.c.0.s8 %v1447
        %v1449 = vperm.slane %v1443, %v1448
        %v1451 = vunpack.c.l.s4 1983009808
        %v1452 = vunpack.c.0.s8 %v1451
        %v1453 = vperm.slane %v1445, %v1452
        %v1454 = vrot.slane %v649, 4
        %v1455 = vsel %vm982, %v1454, %v623
        %v1456 = vrot.slane %v623, 4
        %v1457 = vsel %vm982, %v649, %v1456
        %v1459 = vunpack.c.l.s4 1983009808
        %v1460 = vunpack.c.0.s8 %v1459
        %v1461 = vperm.slane %v1455, %v1460
        %v1463 = vunpack.c.l.s4 1983009808
        %v1464 = vunpack.c.0.s8 %v1463
        %v1465 = vperm.slane %v1457, %v1464
        %v1466 = vrot.slane %v662, 4
        %v1467 = vsel %vm982, %v1466, %v636
        %v1468 = vrot.slane %v636, 4
        %v1469 = vsel %vm982, %v662, %v1468
        %v1471 = vunpack.c.l.s4 1983009808
        %v1472 = vunpack.c.0.s8 %v1471
        %v1473 = vperm.slane %v1467, %v1472
        %v1475 = vunpack.c.l.s4 1983009808
        %v1476 = vunpack.c.0.s8 %v1475
        %v1477 = vperm.slane %v1469, %v1476
        %v1478 = vrot.slane %v1449, 4
        %v1479 = vsel %vm982, %v1478, %v1437
        %v1480 = vrot.slane %v1437, 4
        %v1481 = vsel %vm982, %v1449, %v1480
        %v1483 = vunpack.c.l.s4 1934713408
        %v1484 = vunpack.c.0.s8 %v1483
        %v1485 = vperm.slane %v1479, %v1484
        %v1487 = vunpack.c.l.s4 1934713408
        %v1488 = vunpack.c.0.s8 %v1487
        %v1489 = vperm.slane %v1481, %v1488
        %v1490 = vrot.slane %v1453, 4
        %v1491 = vsel %vm982, %v1490, %v1441
        %v1492 = vrot.slane %v1441, 4
        %v1493 = vsel %vm982, %v1453, %v1492
        %v1495 = vunpack.c.l.s4 1934713408
        %v1496 = vunpack.c.0.s8 %v1495
        %v1497 = vperm.slane %v1491, %v1496
        %v1499 = vunpack.c.l.s4 1934713408
        %v1500 = vunpack.c.0.s8 %v1499
        %v1501 = vperm.slane %v1493, %v1500
        %v1502 = vrot.slane %v1473, 4
        %v1503 = vsel %vm982, %v1502, %v1461
        %v1504 = vrot.slane %v1461, 4
        %v1505 = vsel %vm982, %v1473, %v1504
        %v1507 = vunpack.c.l.s4 1934713408
        %v1508 = vunpack.c.0.s8 %v1507
        %v1509 = vperm.slane %v1503, %v1508
        %v1511 = vunpack.c.l.s4 1934713408
        %v1512 = vunpack.c.0.s8 %v1511
        %v1513 = vperm.slane %v1505, %v1512
        %v1514 = vrot.slane %v1477, 4
        %v1515 = vsel %vm982, %v1514, %v1465
        %v1516 = vrot.slane %v1465, 4
        %v1517 = vsel %vm982, %v1477, %v1516
        %v1519 = vunpack.c.l.s4 1934713408
        %v1520 = vunpack.c.0.s8 %v1519
        %v1521 = vperm.slane %v1515, %v1520
        %v1523 = vunpack.c.l.s4 1934713408
        %v1524 = vunpack.c.0.s8 %v1523
        %v1525 = vperm.slane %v1517, %v1524
        %v1526 = vrot.slane %v1509, 4
        %v1527 = vsel %vm982, %v1526, %v1485
        %v1528 = vrot.slane %v1485, 4
        %v1529 = vsel %vm982, %v1509, %v1528
        %v1530 = vrot.slane %v1513, 4
        %v1531 = vsel %vm982, %v1530, %v1489
        %v1532 = vrot.slane %v1489, 4
        %v1533 = vsel %vm982, %v1513, %v1532
        %v1534 = vrot.slane %v1521, 4
        %v1535 = vsel %vm982, %v1534, %v1497
        %v1536 = vrot.slane %v1497, 4
        %v1537 = vsel %vm982, %v1521, %v1536
        %v1538 = vrot.slane %v1525, 4
        %v1539 = vsel %vm982, %v1538, %v1501
        %v1540 = vrot.slane %v1501, 4
        %v1541 = vsel %vm982, %v1525, %v1540
        %v1542 = vrot.slane %v701, 4
        %v1543 = vsel %vm982, %v1542, %v675
        %v1544 = vrot.slane %v675, 4
        %v1545 = vsel %vm982, %v701, %v1544
        %v1547 = vunpack.c.l.s4 1983009808
        %v1548 = vunpack.c.0.s8 %v1547
        %v1549 = vperm.slane %v1543, %v1548
        %v1551 = vunpack.c.l.s4 1983009808
        %v1552 = vunpack.c.0.s8 %v1551
        %v1553 = vperm.slane %v1545, %v1552
        %v1554 = vrot.slane %v714, 4
        %v1555 = vsel %vm982, %v1554, %v688
        %v1556 = vrot.slane %v688, 4
        %v1557 = vsel %vm982, %v714, %v1556
        %v1559 = vunpack.c.l.s4 1983009808
        %v1560 = vunpack.c.0.s8 %v1559
        %v1561 = vperm.slane %v1555, %v1560
        %v1563 = vunpack.c.l.s4 1983009808
        %v1564 = vunpack.c.0.s8 %v1563
        %v1565 = vperm.slane %v1557, %v1564
        %v1566 = vrot.slane %v753, 4
        %v1567 = vsel %vm982, %v1566, %v727
        %v1568 = vrot.slane %v727, 4
        %v1569 = vsel %vm982, %v753, %v1568
        %v1571 = vunpack.c.l.s4 1983009808
        %v1572 = vunpack.c.0.s8 %v1571
        %v1573 = vperm.slane %v1567, %v1572
        %v1575 = vunpack.c.l.s4 1983009808
        %v1576 = vunpack.c.0.s8 %v1575
        %v1577 = vperm.slane %v1569, %v1576
        %v1578 = vrot.slane %v766, 4
        %v1579 = vsel %vm982, %v1578, %v740
        %v1580 = vrot.slane %v740, 4
        %v1581 = vsel %vm982, %v766, %v1580
        %v1583 = vunpack.c.l.s4 1983009808
        %v1584 = vunpack.c.0.s8 %v1583
        %v1585 = vperm.slane %v1579, %v1584
        %v1587 = vunpack.c.l.s4 1983009808
        %v1588 = vunpack.c.0.s8 %v1587
        %v1589 = vperm.slane %v1581, %v1588
        %v1590 = vrot.slane %v1561, 4
        %v1591 = vsel %vm982, %v1590, %v1549
        %v1592 = vrot.slane %v1549, 4
        %v1593 = vsel %vm982, %v1561, %v1592
        %v1595 = vunpack.c.l.s4 1934713408
        %v1596 = vunpack.c.0.s8 %v1595
        %v1597 = vperm.slane %v1591, %v1596
        %v1599 = vunpack.c.l.s4 1934713408
        %v1600 = vunpack.c.0.s8 %v1599
        %v1601 = vperm.slane %v1593, %v1600
        %v1602 = vrot.slane %v1565, 4
        %v1603 = vsel %vm982, %v1602, %v1553
        %v1604 = vrot.slane %v1553, 4
        %v1605 = vsel %vm982, %v1565, %v1604
        %v1607 = vunpack.c.l.s4 1934713408
        %v1608 = vunpack.c.0.s8 %v1607
        %v1609 = vperm.slane %v1603, %v1608
        %v1611 = vunpack.c.l.s4 1934713408
        %v1612 = vunpack.c.0.s8 %v1611
        %v1613 = vperm.slane %v1605, %v1612
        %v1614 = vrot.slane %v1585, 4
        %v1615 = vsel %vm982, %v1614, %v1573
        %v1616 = vrot.slane %v1573, 4
        %v1617 = vsel %vm982, %v1585, %v1616
        %v1619 = vunpack.c.l.s4 1934713408
        %v1620 = vunpack.c.0.s8 %v1619
        %v1621 = vperm.slane %v1615, %v1620
        %v1623 = vunpack.c.l.s4 1934713408
        %v1624 = vunpack.c.0.s8 %v1623
        %v1625 = vperm.slane %v1617, %v1624
        %v1626 = vrot.slane %v1589, 4
        %v1627 = vsel %vm982, %v1626, %v1577
        %v1628 = vrot.slane %v1577, 4
        %v1629 = vsel %vm982, %v1589, %v1628
        %v1631 = vunpack.c.l.s4 1934713408
        %v1632 = vunpack.c.0.s8 %v1631
        %v1633 = vperm.slane %v1627, %v1632
        %v1635 = vunpack.c.l.s4 1934713408
        %v1636 = vunpack.c.0.s8 %v1635
        %v1637 = vperm.slane %v1629, %v1636
        %v1638 = vrot.slane %v1621, 4
        %v1639 = vsel %vm982, %v1638, %v1597
        %v1640 = vrot.slane %v1597, 4
        %v1641 = vsel %vm982, %v1621, %v1640
        %v1642 = vrot.slane %v1625, 4
        %v1643 = vsel %vm982, %v1642, %v1601
        %v1644 = vrot.slane %v1601, 4
        %v1645 = vsel %vm982, %v1625, %v1644
        %v1646 = vrot.slane %v1633, 4
        %v1647 = vsel %vm982, %v1646, %v1609
        %v1648 = vrot.slane %v1609, 4
        %v1649 = vsel %vm982, %v1633, %v1648
        %v1650 = vrot.slane %v1637, 4
        %v1651 = vsel %vm982, %v1650, %v1613
        %v1652 = vrot.slane %v1613, 4
        %v1653 = vsel %vm982, %v1637, %v1652
        %v1654 = vrot.slane %v805, 4
        %v1655 = vsel %vm982, %v1654, %v779
        %v1656 = vrot.slane %v779, 4
        %v1657 = vsel %vm982, %v805, %v1656
        %v1659 = vunpack.c.l.s4 1983009808
        %v1660 = vunpack.c.0.s8 %v1659
        %v1661 = vperm.slane %v1655, %v1660
        %v1663 = vunpack.c.l.s4 1983009808
        %v1664 = vunpack.c.0.s8 %v1663
        %v1665 = vperm.slane %v1657, %v1664
        %v1666 = vrot.slane %v818, 4
        %v1667 = vsel %vm982, %v1666, %v792
        %v1668 = vrot.slane %v792, 4
        %v1669 = vsel %vm982, %v818, %v1668
        %v1671 = vunpack.c.l.s4 1983009808
        %v1672 = vunpack.c.0.s8 %v1671
        %v1673 = vperm.slane %v1667, %v1672
        %v1675 = vunpack.c.l.s4 1983009808
        %v1676 = vunpack.c.0.s8 %v1675
        %v1677 = vperm.slane %v1669, %v1676
        %v1678 = vrot.slane %v857, 4
        %v1679 = vsel %vm982, %v1678, %v831
        %v1680 = vrot.slane %v831, 4
        %v1681 = vsel %vm982, %v857, %v1680
        %v1683 = vunpack.c.l.s4 1983009808
        %v1684 = vunpack.c.0.s8 %v1683
        %v1685 = vperm.slane %v1679, %v1684
        %v1687 = vunpack.c.l.s4 1983009808
        %v1688 = vunpack.c.0.s8 %v1687
        %v1689 = vperm.slane %v1681, %v1688
        %v1690 = vrot.slane %v870, 4
        %v1691 = vsel %vm982, %v1690, %v844
        %v1692 = vrot.slane %v844, 4
        %v1693 = vsel %vm982, %v870, %v1692
        %v1695 = vunpack.c.l.s4 1983009808
        %v1696 = vunpack.c.0.s8 %v1695
        %v1697 = vperm.slane %v1691, %v1696
        %v1699 = vunpack.c.l.s4 1983009808
        %v1700 = vunpack.c.0.s8 %v1699
        %v1701 = vperm.slane %v1693, %v1700
        %v1702 = vrot.slane %v1673, 4
        %v1703 = vsel %vm982, %v1702, %v1661
        %v1704 = vrot.slane %v1661, 4
        %v1705 = vsel %vm982, %v1673, %v1704
        %v1707 = vunpack.c.l.s4 1934713408
        %v1708 = vunpack.c.0.s8 %v1707
        %v1709 = vperm.slane %v1703, %v1708
        %v1711 = vunpack.c.l.s4 1934713408
        %v1712 = vunpack.c.0.s8 %v1711
        %v1713 = vperm.slane %v1705, %v1712
        %v1714 = vrot.slane %v1677, 4
        %v1715 = vsel %vm982, %v1714, %v1665
        %v1716 = vrot.slane %v1665, 4
        %v1717 = vsel %vm982, %v1677, %v1716
        %v1719 = vunpack.c.l.s4 1934713408
        %v1720 = vunpack.c.0.s8 %v1719
        %v1721 = vperm.slane %v1715, %v1720
        %v1723 = vunpack.c.l.s4 1934713408
        %v1724 = vunpack.c.0.s8 %v1723
        %v1725 = vperm.slane %v1717, %v1724
        %v1726 = vrot.slane %v1697, 4
        %v1727 = vsel %vm982, %v1726, %v1685
        %v1728 = vrot.slane %v1685, 4
        %v1729 = vsel %vm982, %v1697, %v1728
        %v1731 = vunpack.c.l.s4 1934713408
        %v1732 = vunpack.c.0.s8 %v1731
        %v1733 = vperm.slane %v1727, %v1732
        %v1735 = vunpack.c.l.s4 1934713408
        %v1736 = vunpack.c.0.s8 %v1735
        %v1737 = vperm.slane %v1729, %v1736
        %v1738 = vrot.slane %v1701, 4
        %v1739 = vsel %vm982, %v1738, %v1689
        %v1740 = vrot.slane %v1689, 4
        %v1741 = vsel %vm982, %v1701, %v1740
        %v1743 = vunpack.c.l.s4 1934713408
        %v1744 = vunpack.c.0.s8 %v1743
        %v1745 = vperm.slane %v1739, %v1744
        %v1747 = vunpack.c.l.s4 1934713408
        %v1748 = vunpack.c.0.s8 %v1747
        %v1749 = vperm.slane %v1741, %v1748
        %v1750 = vrot.slane %v1733, 4
        %v1751 = vsel %vm982, %v1750, %v1709
        %v1752 = vrot.slane %v1709, 4
        %v1753 = vsel %vm982, %v1733, %v1752
        %v1754 = vrot.slane %v1737, 4
        %v1755 = vsel %vm982, %v1754, %v1713
        %v1756 = vrot.slane %v1713, 4
        %v1757 = vsel %vm982, %v1737, %v1756
        %v1758 = vrot.slane %v1745, 4
        %v1759 = vsel %vm982, %v1758, %v1721
        %v1760 = vrot.slane %v1721, 4
        %v1761 = vsel %vm982, %v1745, %v1760
        %v1762 = vrot.slane %v1749, 4
        %v1763 = vsel %vm982, %v1762, %v1725
        %v1764 = vrot.slane %v1725, 4
        %v1765 = vsel %vm982, %v1749, %v1764
        %v1766 = vrot.slane %v909, 4
        %v1767 = vsel %vm982, %v1766, %v883
        %v1768 = vrot.slane %v883, 4
        %v1769 = vsel %vm982, %v909, %v1768
        %v1771 = vunpack.c.l.s4 1983009808
        %v1772 = vunpack.c.0.s8 %v1771
        %v1773 = vperm.slane %v1767, %v1772
        %v1775 = vunpack.c.l.s4 1983009808
        %v1776 = vunpack.c.0.s8 %v1775
        %v1777 = vperm.slane %v1769, %v1776
        %v1778 = vrot.slane %v922, 4
        %v1779 = vsel %vm982, %v1778, %v896
        %v1780 = vrot.slane %v896, 4
        %v1781 = vsel %vm982, %v922, %v1780
        %v1783 = vunpack.c.l.s4 1983009808
        %v1784 = vunpack.c.0.s8 %v1783
        %v1785 = vperm.slane %v1779, %v1784
        %v1787 = vunpack.c.l.s4 1983009808
        %v1788 = vunpack.c.0.s8 %v1787
        %v1789 = vperm.slane %v1781, %v1788
        %v1790 = vrot.slane %v961, 4
        %v1791 = vsel %vm982, %v1790, %v935
        %v1792 = vrot.slane %v935, 4
        %v1793 = vsel %vm982, %v961, %v1792
        %v1795 = vunpack.c.l.s4 1983009808
        %v1796 = vunpack.c.0.s8 %v1795
        %v1797 = vperm.slane %v1791, %v1796
        %v1799 = vunpack.c.l.s4 1983009808
        %v1800 = vunpack.c.0.s8 %v1799
        %v1801 = vperm.slane %v1793, %v1800
        %v1802 = vrot.slane %v974, 4
        %v1803 = vsel %vm982, %v1802, %v948
        %v1804 = vrot.slane %v948, 4
        %v1805 = vsel %vm982, %v974, %v1804
        %v1807 = vunpack.c.l.s4 1983009808
        %v1808 = vunpack.c.0.s8 %v1807
        %v1809 = vperm.slane %v1803, %v1808
        %v1811 = vunpack.c.l.s4 1983009808
        %v1812 = vunpack.c.0.s8 %v1811
        %v1813 = vperm.slane %v1805, %v1812
        %v1814 = vrot.slane %v1785, 4
        %v1815 = vsel %vm982, %v1814, %v1773
        %v1816 = vrot.slane %v1773, 4
        %v1817 = vsel %vm982, %v1785, %v1816
        %v1819 = vunpack.c.l.s4 1934713408
        %v1820 = vunpack.c.0.s8 %v1819
        %v1821 = vperm.slane %v1815, %v1820
        %v1823 = vunpack.c.l.s4 1934713408
        %v1824 = vunpack.c.0.s8 %v1823
        %v1825 = vperm.slane %v1817, %v1824
        %v1826 = vrot.slane %v1789, 4
        %v1827 = vsel %vm982, %v1826, %v1777
        %v1828 = vrot.slane %v1777, 4
        %v1829 = vsel %vm982, %v1789, %v1828
        %v1831 = vunpack.c.l.s4 1934713408
        %v1832 = vunpack.c.0.s8 %v1831
        %v1833 = vperm.slane %v1827, %v1832
        %v1835 = vunpack.c.l.s4 1934713408
        %v1836 = vunpack.c.0.s8 %v1835
        %v1837 = vperm.slane %v1829, %v1836
        %v1838 = vrot.slane %v1809, 4
        %v1839 = vsel %vm982, %v1838, %v1797
        %v1840 = vrot.slane %v1797, 4
        %v1841 = vsel %vm982, %v1809, %v1840
        %v1843 = vunpack.c.l.s4 1934713408
        %v1844 = vunpack.c.0.s8 %v1843
        %v1845 = vperm.slane %v1839, %v1844
        %v1847 = vunpack.c.l.s4 1934713408
        %v1848 = vunpack.c.0.s8 %v1847
        %v1849 = vperm.slane %v1841, %v1848
        %v1850 = vrot.slane %v1813, 4
        %v1851 = vsel %vm982, %v1850, %v1801
        %v1852 = vrot.slane %v1801, 4
        %v1853 = vsel %vm982, %v1813, %v1852
        %v1855 = vunpack.c.l.s4 1934713408
        %v1856 = vunpack.c.0.s8 %v1855
        %v1857 = vperm.slane %v1851, %v1856
        %v1859 = vunpack.c.l.s4 1934713408
        %v1860 = vunpack.c.0.s8 %v1859
        %v1861 = vperm.slane %v1853, %v1860
        %v1862 = vrot.slane %v1845, 4
        %v1863 = vsel %vm982, %v1862, %v1821
        %v1864 = vrot.slane %v1821, 4
        %v1865 = vsel %vm982, %v1845, %v1864
        %v1866 = vrot.slane %v1849, 4
        %v1867 = vsel %vm982, %v1866, %v1825
        %v1868 = vrot.slane %v1825, 4
        %v1869 = vsel %vm982, %v1849, %v1868
        %v1870 = vrot.slane %v1857, 4
        %v1871 = vsel %vm982, %v1870, %v1833
        %v1872 = vrot.slane %v1833, 4
        %v1873 = vsel %vm982, %v1857, %v1872
        %v1874 = vrot.slane %v1861, 4
        %v1875 = vsel %vm982, %v1874, %v1837
        %v1876 = vrot.slane %v1837, 4
        %v1877 = vsel %vm982, %v1861, %v1876
        %v1878 = vrot.slane %v187, 4
        %v1879 = vsel %vm982, %v1878, %v161
        %v1880 = vrot.slane %v161, 4
        %v1881 = vsel %vm982, %v187, %v1880
        %v1883 = vunpack.c.l.s4 1983009808
        %v1884 = vunpack.c.0.s8 %v1883
        %v1885 = vperm.slane %v1879, %v1884
        %v1887 = vunpack.c.l.s4 1983009808
        %v1888 = vunpack.c.0.s8 %v1887
        %v1889 = vperm.slane %v1881, %v1888
        %v1890 = vrot.slane %v200, 4
        %v1891 = vsel %vm982, %v1890, %v174
        %v1892 = vrot.slane %v174, 4
        %v1893 = vsel %vm982, %v200, %v1892
        %v1895 = vunpack.c.l.s4 1983009808
        %v1896 = vunpack.c.0.s8 %v1895
        %v1897 = vperm.slane %v1891, %v1896
        %v1899 = vunpack.c.l.s4 1983009808
        %v1900 = vunpack.c.0.s8 %v1899
        %v1901 = vperm.slane %v1893, %v1900
        %v1902 = vrot.slane %v239, 4
        %v1903 = vsel %vm982, %v1902, %v213
        %v1904 = vrot.slane %v213, 4
        %v1905 = vsel %vm982, %v239, %v1904
        %v1907 = vunpack.c.l.s4 1983009808
        %v1908 = vunpack.c.0.s8 %v1907
        %v1909 = vperm.slane %v1903, %v1908
        %v1911 = vunpack.c.l.s4 1983009808
        %v1912 = vunpack.c.0.s8 %v1911
        %v1913 = vperm.slane %v1905, %v1912
        %v1914 = vrot.slane %v252, 4
        %v1915 = vsel %vm982, %v1914, %v226
        %v1916 = vrot.slane %v226, 4
        %v1917 = vsel %vm982, %v252, %v1916
        %v1919 = vunpack.c.l.s4 1983009808
        %v1920 = vunpack.c.0.s8 %v1919
        %v1921 = vperm.slane %v1915, %v1920
        %v1923 = vunpack.c.l.s4 1983009808
        %v1924 = vunpack.c.0.s8 %v1923
        %v1925 = vperm.slane %v1917, %v1924
        %v1926 = vrot.slane %v1897, 4
        %v1927 = vsel %vm982, %v1926, %v1885
        %v1928 = vrot.slane %v1885, 4
        %v1929 = vsel %vm982, %v1897, %v1928
        %v1931 = vunpack.c.l.s4 1934713408
        %v1932 = vunpack.c.0.s8 %v1931
        %v1933 = vperm.slane %v1927, %v1932
        %v1935 = vunpack.c.l.s4 1934713408
        %v1936 = vunpack.c.0.s8 %v1935
        %v1937 = vperm.slane %v1929, %v1936
        %v1938 = vrot.slane %v1901, 4
        %v1939 = vsel %vm982, %v1938, %v1889
        %v1940 = vrot.slane %v1889, 4
        %v1941 = vsel %vm982, %v1901, %v1940
        %v1943 = vunpack.c.l.s4 1934713408
        %v1944 = vunpack.c.0.s8 %v1943
        %v1945 = vperm.slane %v1939, %v1944
        %v1947 = vunpack.c.l.s4 1934713408
        %v1948 = vunpack.c.0.s8 %v1947
        %v1949 = vperm.slane %v1941, %v1948
        %v1950 = vrot.slane %v1921, 4
        %v1951 = vsel %vm982, %v1950, %v1909
        %v1952 = vrot.slane %v1909, 4
        %v1953 = vsel %vm982, %v1921, %v1952
        %v1955 = vunpack.c.l.s4 1934713408
        %v1956 = vunpack.c.0.s8 %v1955
        %v1957 = vperm.slane %v1951, %v1956
        %v1959 = vunpack.c.l.s4 1934713408
        %v1960 = vunpack.c.0.s8 %v1959
        %v1961 = vperm.slane %v1953, %v1960
        %v1962 = vrot.slane %v1925, 4
        %v1963 = vsel %vm982, %v1962, %v1913
        %v1964 = vrot.slane %v1913, 4
        %v1965 = vsel %vm982, %v1925, %v1964
        %v1967 = vunpack.c.l.s4 1934713408
        %v1968 = vunpack.c.0.s8 %v1967
        %v1969 = vperm.slane %v1963, %v1968
        %v1971 = vunpack.c.l.s4 1934713408
        %v1972 = vunpack.c.0.s8 %v1971
        %v1973 = vperm.slane %v1965, %v1972
        %v1974 = vrot.slane %v1957, 4
        %v1975 = vsel %vm982, %v1974, %v1933
        %v1976 = vrot.slane %v1933, 4
        %v1977 = vsel %vm982, %v1957, %v1976
        %v1978 = vrot.slane %v1961, 4
        %v1979 = vsel %vm982, %v1978, %v1937
        %v1980 = vrot.slane %v1937, 4
        %v1981 = vsel %vm982, %v1961, %v1980
        %v1982 = vrot.slane %v1969, 4
        %v1983 = vsel %vm982, %v1982, %v1945
        %v1984 = vrot.slane %v1945, 4
        %v1985 = vsel %vm982, %v1969, %v1984
        %v1986 = vrot.slane %v1973, 4
        %v1987 = vsel %vm982, %v1986, %v1949
        %v1988 = vrot.slane %v1949, 4
        %v1989 = vsel %vm982, %v1973, %v1988
        %v1990 = vrot.slane %v291, 4
        %v1991 = vsel %vm982, %v1990, %v265
        %v1992 = vrot.slane %v265, 4
        %v1993 = vsel %vm982, %v291, %v1992
        %v1995 = vunpack.c.l.s4 1983009808
        %v1996 = vunpack.c.0.s8 %v1995
        %v1997 = vperm.slane %v1991, %v1996
        %v1999 = vunpack.c.l.s4 1983009808
        %v2000 = vunpack.c.0.s8 %v1999
        %v2001 = vperm.slane %v1993, %v2000
        %v2002 = vrot.slane %v304, 4
        %v2003 = vsel %vm982, %v2002, %v278
        %v2004 = vrot.slane %v278, 4
        %v2005 = vsel %vm982, %v304, %v2004
        %v2007 = vunpack.c.l.s4 1983009808
        %v2008 = vunpack.c.0.s8 %v2007
        %v2009 = vperm.slane %v2003, %v2008
        %v2011 = vunpack.c.l.s4 1983009808
        %v2012 = vunpack.c.0.s8 %v2011
        %v2013 = vperm.slane %v2005, %v2012
        %v2014 = vrot.slane %v343, 4
        %v2015 = vsel %vm982, %v2014, %v317
        %v2016 = vrot.slane %v317, 4
        %v2017 = vsel %vm982, %v343, %v2016
        %v2019 = vunpack.c.l.s4 1983009808
        %v2020 = vunpack.c.0.s8 %v2019
        %v2021 = vperm.slane %v2015, %v2020
        %v2023 = vunpack.c.l.s4 1983009808
        %v2024 = vunpack.c.0.s8 %v2023
        %v2025 = vperm.slane %v2017, %v2024
        %v2026 = vrot.slane %v356, 4
        %v2027 = vsel %vm982, %v2026, %v330
        %v2028 = vrot.slane %v330, 4
        %v2029 = vsel %vm982, %v356, %v2028
        %v2031 = vunpack.c.l.s4 1983009808
        %v2032 = vunpack.c.0.s8 %v2031
        %v2033 = vperm.slane %v2027, %v2032
        %v2035 = vunpack.c.l.s4 1983009808
        %v2036 = vunpack.c.0.s8 %v2035
        %v2037 = vperm.slane %v2029, %v2036
        %v2038 = vrot.slane %v2009, 4
        %v2039 = vsel %vm982, %v2038, %v1997
        %v2040 = vrot.slane %v1997, 4
        %v2041 = vsel %vm982, %v2009, %v2040
        %v2043 = vunpack.c.l.s4 1934713408
        %v2044 = vunpack.c.0.s8 %v2043
        %v2045 = vperm.slane %v2039, %v2044
        %v2047 = vunpack.c.l.s4 1934713408
        %v2048 = vunpack.c.0.s8 %v2047
        %v2049 = vperm.slane %v2041, %v2048
        %v2050 = vrot.slane %v2013, 4
        %v2051 = vsel %vm982, %v2050, %v2001
        %v2052 = vrot.slane %v2001, 4
        %v2053 = vsel %vm982, %v2013, %v2052
        %v2055 = vunpack.c.l.s4 1934713408
        %v2056 = vunpack.c.0.s8 %v2055
        %v2057 = vperm.slane %v2051, %v2056
        %v2059 = vunpack.c.l.s4 1934713408
        %v2060 = vunpack.c.0.s8 %v2059
        %v2061 = vperm.slane %v2053, %v2060
        %v2062 = vrot.slane %v2033, 4
        %v2063 = vsel %vm982, %v2062, %v2021
        %v2064 = vrot.slane %v2021, 4
        %v2065 = vsel %vm982, %v2033, %v2064
        %v2067 = vunpack.c.l.s4 1934713408
        %v2068 = vunpack.c.0.s8 %v2067
        %v2069 = vperm.slane %v2063, %v2068
        %v2071 = vunpack.c.l.s4 1934713408
        %v2072 = vunpack.c.0.s8 %v2071
        %v2073 = vperm.slane %v2065, %v2072
        %v2074 = vrot.slane %v2037, 4
        %v2075 = vsel %vm982, %v2074, %v2025
        %v2076 = vrot.slane %v2025, 4
        %v2077 = vsel %vm982, %v2037, %v2076
        %v2079 = vunpack.c.l.s4 1934713408
        %v2080 = vunpack.c.0.s8 %v2079
        %v2081 = vperm.slane %v2075, %v2080
        %v2083 = vunpack.c.l.s4 1934713408
        %v2084 = vunpack.c.0.s8 %v2083
        %v2085 = vperm.slane %v2077, %v2084
        %v2086 = vrot.slane %v2069, 4
        %v2087 = vsel %vm982, %v2086, %v2045
        %v2088 = vrot.slane %v2045, 4
        %v2089 = vsel %vm982, %v2069, %v2088
        %v2090 = vrot.slane %v2073, 4
        %v2091 = vsel %vm982, %v2090, %v2049
        %v2092 = vrot.slane %v2049, 4
        %v2093 = vsel %vm982, %v2073, %v2092
        %v2094 = vrot.slane %v2081, 4
        %v2095 = vsel %vm982, %v2094, %v2057
        %v2096 = vrot.slane %v2057, 4
        %v2097 = vsel %vm982, %v2081, %v2096
        %v2098 = vrot.slane %v2085, 4
        %v2099 = vsel %vm982, %v2098, %v2061
        %v2100 = vrot.slane %v2061, 4
        %v2101 = vsel %vm982, %v2085, %v2100
        %v2102 = vrot.slane %v395, 4
        %v2103 = vsel %vm982, %v2102, %v369
        %v2104 = vrot.slane %v369, 4
        %v2105 = vsel %vm982, %v395, %v2104
        %v2107 = vunpack.c.l.s4 1983009808
        %v2108 = vunpack.c.0.s8 %v2107
        %v2109 = vperm.slane %v2103, %v2108
        %v2111 = vunpack.c.l.s4 1983009808
        %v2112 = vunpack.c.0.s8 %v2111
        %v2113 = vperm.slane %v2105, %v2112
        %v2114 = vrot.slane %v408, 4
        %v2115 = vsel %vm982, %v2114, %v382
        %v2116 = vrot.slane %v382, 4
        %v2117 = vsel %vm982, %v408, %v2116
        %v2119 = vunpack.c.l.s4 1983009808
        %v2120 = vunpack.c.0.s8 %v2119
        %v2121 = vperm.slane %v2115, %v2120
        %v2123 = vunpack.c.l.s4 1983009808
        %v2124 = vunpack.c.0.s8 %v2123
        %v2125 = vperm.slane %v2117, %v2124
        %v2126 = vrot.slane %v447, 4
        %v2127 = vsel %vm982, %v2126, %v421
        %v2128 = vrot.slane %v421, 4
        %v2129 = vsel %vm982, %v447, %v2128
        %v2131 = vunpack.c.l.s4 1983009808
        %v2132 = vunpack.c.0.s8 %v2131
        %v2133 = vperm.slane %v2127, %v2132
        %v2135 = vunpack.c.l.s4 1983009808
        %v2136 = vunpack.c.0.s8 %v2135
        %v2137 = vperm.slane %v2129, %v2136
        %v2138 = vrot.slane %v460, 4
        %v2139 = vsel %vm982, %v2138, %v434
        %v2140 = vrot.slane %v434, 4
        %v2141 = vsel %vm982, %v460, %v2140
        %v2143 = vunpack.c.l.s4 1983009808
        %v2144 = vunpack.c.0.s8 %v2143
        %v2145 = vperm.slane %v2139, %v2144
        %v2147 = vunpack.c.l.s4 1983009808
        %v2148 = vunpack.c.0.s8 %v2147
        %v2149 = vperm.slane %v2141, %v2148
        %v2150 = vrot.slane %v2121, 4
        %v2151 = vsel %vm982, %v2150, %v2109
        %v2152 = vrot.slane %v2109, 4
        %v2153 = vsel %vm982, %v2121, %v2152
        %v2155 = vunpack.c.l.s4 1934713408
        %v2156 = vunpack.c.0.s8 %v2155
        %v2157 = vperm.slane %v2151, %v2156
        %v2159 = vunpack.c.l.s4 1934713408
        %v2160 = vunpack.c.0.s8 %v2159
        %v2161 = vperm.slane %v2153, %v2160
        %v2162 = vrot.slane %v2125, 4
        %v2163 = vsel %vm982, %v2162, %v2113
        %v2164 = vrot.slane %v2113, 4
        %v2165 = vsel %vm982, %v2125, %v2164
        %v2167 = vunpack.c.l.s4 1934713408
        %v2168 = vunpack.c.0.s8 %v2167
        %v2169 = vperm.slane %v2163, %v2168
        %v2171 = vunpack.c.l.s4 1934713408
        %v2172 = vunpack.c.0.s8 %v2171
        %v2173 = vperm.slane %v2165, %v2172
        %v2174 = vrot.slane %v2145, 4
        %v2175 = vsel %vm982, %v2174, %v2133
        %v2176 = vrot.slane %v2133, 4
        %v2177 = vsel %vm982, %v2145, %v2176
        %v2179 = vunpack.c.l.s4 1934713408
        %v2180 = vunpack.c.0.s8 %v2179
        %v2181 = vperm.slane %v2175, %v2180
        %v2183 = vunpack.c.l.s4 1934713408
        %v2184 = vunpack.c.0.s8 %v2183
        %v2185 = vperm.slane %v2177, %v2184
        %v2186 = vrot.slane %v2149, 4
        %v2187 = vsel %vm982, %v2186, %v2137
        %v2188 = vrot.slane %v2137, 4
        %v2189 = vsel %vm982, %v2149, %v2188
        %v2191 = vunpack.c.l.s4 1934713408
        %v2192 = vunpack.c.0.s8 %v2191
        %v2193 = vperm.slane %v2187, %v2192
        %v2195 = vunpack.c.l.s4 1934713408
        %v2196 = vunpack.c.0.s8 %v2195
        %v2197 = vperm.slane %v2189, %v2196
        %v2198 = vrot.slane %v2181, 4
        %v2199 = vsel %vm982, %v2198, %v2157
        %v2200 = vrot.slane %v2157, 4
        %v2201 = vsel %vm982, %v2181, %v2200
        %v2202 = vrot.slane %v2185, 4
        %v2203 = vsel %vm982, %v2202, %v2161
        %v2204 = vrot.slane %v2161, 4
        %v2205 = vsel %vm982, %v2185, %v2204
        %v2206 = vrot.slane %v2193, 4
        %v2207 = vsel %vm982, %v2206, %v2169
        %v2208 = vrot.slane %v2169, 4
        %v2209 = vsel %vm982, %v2193, %v2208
        %v2210 = vrot.slane %v2197, 4
        %v2211 = vsel %vm982, %v2210, %v2173
        %v2212 = vrot.slane %v2173, 4
        %v2213 = vsel %vm982, %v2197, %v2212
        %v2214 = vrot.slane %v499, 4
        %v2215 = vsel %vm982, %v2214, %v473
        %v2216 = vrot.slane %v473, 4
        %v2217 = vsel %vm982, %v499, %v2216
        %v2219 = vunpack.c.l.s4 1983009808
        %v2220 = vunpack.c.0.s8 %v2219
        %v2221 = vperm.slane %v2215, %v2220
        %v2223 = vunpack.c.l.s4 1983009808
        %v2224 = vunpack.c.0.s8 %v2223
        %v2225 = vperm.slane %v2217, %v2224
        %v2226 = vrot.slane %v512, 4
        %v2227 = vsel %vm982, %v2226, %v486
        %v2228 = vrot.slane %v486, 4
        %v2229 = vsel %vm982, %v512, %v2228
        %v2231 = vunpack.c.l.s4 1983009808
        %v2232 = vunpack.c.0.s8 %v2231
        %v2233 = vperm.slane %v2227, %v2232
        %v2235 = vunpack.c.l.s4 1983009808
        %v2236 = vunpack.c.0.s8 %v2235
        %v2237 = vperm.slane %v2229, %v2236
        %v2238 = vrot.slane %v551, 4
        %v2239 = vsel %vm982, %v2238, %v525
        %v2240 = vrot.slane %v525, 4
        %v2241 = vsel %vm982, %v551, %v2240
        %v2243 = vunpack.c.l.s4 1983009808
        %v2244 = vunpack.c.0.s8 %v2243
        %v2245 = vperm.slane %v2239, %v2244
        %v2247 = vunpack.c.l.s4 1983009808
        %v2248 = vunpack.c.0.s8 %v2247
        %v2249 = vperm.slane %v2241, %v2248
        %v2250 = vrot.slane %v564, 4
        %v2251 = vsel %vm982, %v2250, %v538
        %v2252 = vrot.slane %v538, 4
        %v2253 = vsel %vm982, %v564, %v2252
        %v2255 = vunpack.c.l.s4 1983009808
        %v2256 = vunpack.c.0.s8 %v2255
        %v2257 = vperm.slane %v2251, %v2256
        %v2259 = vunpack.c.l.s4 1983009808
        %v2260 = vunpack.c.0.s8 %v2259
        %v2261 = vperm.slane %v2253, %v2260
        %v2262 = vrot.slane %v2233, 4
        %v2263 = vsel %vm982, %v2262, %v2221
        %v2264 = vrot.slane %v2221, 4
        %v2265 = vsel %vm982, %v2233, %v2264
        %v2267 = vunpack.c.l.s4 1934713408
        %v2268 = vunpack.c.0.s8 %v2267
        %v2269 = vperm.slane %v2263, %v2268
        %v2271 = vunpack.c.l.s4 1934713408
        %v2272 = vunpack.c.0.s8 %v2271
        %v2273 = vperm.slane %v2265, %v2272
        %v2274 = vrot.slane %v2237, 4
        %v2275 = vsel %vm982, %v2274, %v2225
        %v2276 = vrot.slane %v2225, 4
        %v2277 = vsel %vm982, %v2237, %v2276
        %v2279 = vunpack.c.l.s4 1934713408
        %v2280 = vunpack.c.0.s8 %v2279
        %v2281 = vperm.slane %v2275, %v2280
        %v2283 = vunpack.c.l.s4 1934713408
        %v2284 = vunpack.c.0.s8 %v2283
        %v2285 = vperm.slane %v2277, %v2284
        %v2286 = vrot.slane %v2257, 4
        %v2287 = vsel %vm982, %v2286, %v2245
        %v2288 = vrot.slane %v2245, 4
        %v2289 = vsel %vm982, %v2257, %v2288
        %v2291 = vunpack.c.l.s4 1934713408
        %v2292 = vunpack.c.0.s8 %v2291
        %v2293 = vperm.slane %v2287, %v2292
        %v2295 = vunpack.c.l.s4 1934713408
        %v2296 = vunpack.c.0.s8 %v2295
        %v2297 = vperm.slane %v2289, %v2296
        %v2298 = vrot.slane %v2261, 4
        %v2299 = vsel %vm982, %v2298, %v2249
        %v2300 = vrot.slane %v2249, 4
        %v2301 = vsel %vm982, %v2261, %v2300
        %v2303 = vunpack.c.l.s4 1934713408
        %v2304 = vunpack.c.0.s8 %v2303
        %v2305 = vperm.slane %v2299, %v2304
        %v2307 = vunpack.c.l.s4 1934713408
        %v2308 = vunpack.c.0.s8 %v2307
        %v2309 = vperm.slane %v2301, %v2308
        %v2310 = vrot.slane %v2293, 4
        %v2311 = vsel %vm982, %v2310, %v2269
        %v2312 = vrot.slane %v2269, 4
        %v2313 = vsel %vm982, %v2293, %v2312
        %v2314 = vrot.slane %v2297, 4
        %v2315 = vsel %vm982, %v2314, %v2273
        %v2316 = vrot.slane %v2273, 4
        %v2317 = vsel %vm982, %v2297, %v2316
        %v2318 = vrot.slane %v2305, 4
        %v2319 = vsel %vm982, %v2318, %v2281
        %v2320 = vrot.slane %v2281, 4
        %v2321 = vsel %vm982, %v2305, %v2320
        %v2322 = vrot.slane %v2309, 4
        %v2323 = vsel %vm982, %v2322, %v2285
        %v2324 = vrot.slane %v2285, 4
        %v2325 = vsel %vm982, %v2309, %v2324
        %v2326 = vrot.slane %v603, 4
        %v2327 = vsel %vm982, %v2326, %v577
        %v2328 = vrot.slane %v577, 4
        %v2329 = vsel %vm982, %v603, %v2328
        %v2331 = vunpack.c.l.s4 1983009808
        %v2332 = vunpack.c.0.s8 %v2331
        %v2333 = vperm.slane %v2327, %v2332
        %v2335 = vunpack.c.l.s4 1983009808
        %v2336 = vunpack.c.0.s8 %v2335
        %v2337 = vperm.slane %v2329, %v2336
        %v2338 = vrot.slane %v616, 4
        %v2339 = vsel %vm982, %v2338, %v590
        %v2340 = vrot.slane %v590, 4
        %v2341 = vsel %vm982, %v616, %v2340
        %v2343 = vunpack.c.l.s4 1983009808
        %v2344 = vunpack.c.0.s8 %v2343
        %v2345 = vperm.slane %v2339, %v2344
        %v2347 = vunpack.c.l.s4 1983009808
        %v2348 = vunpack.c.0.s8 %v2347
        %v2349 = vperm.slane %v2341, %v2348
        %v2350 = vrot.slane %v655, 4
        %v2351 = vsel %vm982, %v2350, %v629
        %v2352 = vrot.slane %v629, 4
        %v2353 = vsel %vm982, %v655, %v2352
        %v2355 = vunpack.c.l.s4 1983009808
        %v2356 = vunpack.c.0.s8 %v2355
        %v2357 = vperm.slane %v2351, %v2356
        %v2359 = vunpack.c.l.s4 1983009808
        %v2360 = vunpack.c.0.s8 %v2359
        %v2361 = vperm.slane %v2353, %v2360
        %v2362 = vrot.slane %v668, 4
        %v2363 = vsel %vm982, %v2362, %v642
        %v2364 = vrot.slane %v642, 4
        %v2365 = vsel %vm982, %v668, %v2364
        %v2367 = vunpack.c.l.s4 1983009808
        %v2368 = vunpack.c.0.s8 %v2367
        %v2369 = vperm.slane %v2363, %v2368
        %v2371 = vunpack.c.l.s4 1983009808
        %v2372 = vunpack.c.0.s8 %v2371
        %v2373 = vperm.slane %v2365, %v2372
        %v2374 = vrot.slane %v2345, 4
        %v2375 = vsel %vm982, %v2374, %v2333
        %v2376 = vrot.slane %v2333, 4
        %v2377 = vsel %vm982, %v2345, %v2376
        %v2379 = vunpack.c.l.s4 1934713408
        %v2380 = vunpack.c.0.s8 %v2379
        %v2381 = vperm.slane %v2375, %v2380
        %v2383 = vunpack.c.l.s4 1934713408
        %v2384 = vunpack.c.0.s8 %v2383
        %v2385 = vperm.slane %v2377, %v2384
        %v2386 = vrot.slane %v2349, 4
        %v2387 = vsel %vm982, %v2386, %v2337
        %v2388 = vrot.slane %v2337, 4
        %v2389 = vsel %vm982, %v2349, %v2388
        %v2391 = vunpack.c.l.s4 1934713408
        %v2392 = vunpack.c.0.s8 %v2391
        %v2393 = vperm.slane %v2387, %v2392
        %v2395 = vunpack.c.l.s4 1934713408
        %v2396 = vunpack.c.0.s8 %v2395
        %v2397 = vperm.slane %v2389, %v2396
        %v2398 = vrot.slane %v2369, 4
        %v2399 = vsel %vm982, %v2398, %v2357
        %v2400 = vrot.slane %v2357, 4
        %v2401 = vsel %vm982, %v2369, %v2400
        %v2403 = vunpack.c.l.s4 1934713408
        %v2404 = vunpack.c.0.s8 %v2403
        %v2405 = vperm.slane %v2399, %v2404
        %v2407 = vunpack.c.l.s4 1934713408
        %v2408 = vunpack.c.0.s8 %v2407
        %v2409 = vperm.slane %v2401, %v2408
        %v2410 = vrot.slane %v2373, 4
        %v2411 = vsel %vm982, %v2410, %v2361
        %v2412 = vrot.slane %v2361, 4
        %v2413 = vsel %vm982, %v2373, %v2412
        %v2415 = vunpack.c.l.s4 1934713408
        %v2416 = vunpack.c.0.s8 %v2415
        %v2417 = vperm.slane %v2411, %v2416
        %v2419 = vunpack.c.l.s4 1934713408
        %v2420 = vunpack.c.0.s8 %v2419
        %v2421 = vperm.slane %v2413, %v2420
        %v2422 = vrot.slane %v2405, 4
        %v2423 = vsel %vm982, %v2422, %v2381
        %v2424 = vrot.slane %v2381, 4
        %v2425 = vsel %vm982, %v2405, %v2424
        %v2426 = vrot.slane %v2409, 4
        %v2427 = vsel %vm982, %v2426, %v2385
        %v2428 = vrot.slane %v2385, 4
        %v2429 = vsel %vm982, %v2409, %v2428
        %v2430 = vrot.slane %v2417, 4
        %v2431 = vsel %vm982, %v2430, %v2393
        %v2432 = vrot.slane %v2393, 4
        %v2433 = vsel %vm982, %v2417, %v2432
        %v2434 = vrot.slane %v2421, 4
        %v2435 = vsel %vm982, %v2434, %v2397
        %v2436 = vrot.slane %v2397, 4
        %v2437 = vsel %vm982, %v2421, %v2436
        %v2438 = vrot.slane %v707, 4
        %v2439 = vsel %vm982, %v2438, %v681
        %v2440 = vrot.slane %v681, 4
        %v2441 = vsel %vm982, %v707, %v2440
        %v2443 = vunpack.c.l.s4 1983009808
        %v2444 = vunpack.c.0.s8 %v2443
        %v2445 = vperm.slane %v2439, %v2444
        %v2447 = vunpack.c.l.s4 1983009808
        %v2448 = vunpack.c.0.s8 %v2447
        %v2449 = vperm.slane %v2441, %v2448
        %v2450 = vrot.slane %v720, 4
        %v2451 = vsel %vm982, %v2450, %v694
        %v2452 = vrot.slane %v694, 4
        %v2453 = vsel %vm982, %v720, %v2452
        %v2455 = vunpack.c.l.s4 1983009808
        %v2456 = vunpack.c.0.s8 %v2455
        %v2457 = vperm.slane %v2451, %v2456
        %v2459 = vunpack.c.l.s4 1983009808
        %v2460 = vunpack.c.0.s8 %v2459
        %v2461 = vperm.slane %v2453, %v2460
        %v2462 = vrot.slane %v759, 4
        %v2463 = vsel %vm982, %v2462, %v733
        %v2464 = vrot.slane %v733, 4
        %v2465 = vsel %vm982, %v759, %v2464
        %v2467 = vunpack.c.l.s4 1983009808
        %v2468 = vunpack.c.0.s8 %v2467
        %v2469 = vperm.slane %v2463, %v2468
        %v2471 = vunpack.c.l.s4 1983009808
        %v2472 = vunpack.c.0.s8 %v2471
        %v2473 = vperm.slane %v2465, %v2472
        %v2474 = vrot.slane %v772, 4
        %v2475 = vsel %vm982, %v2474, %v746
        %v2476 = vrot.slane %v746, 4
        %v2477 = vsel %vm982, %v772, %v2476
        %v2479 = vunpack.c.l.s4 1983009808
        %v2480 = vunpack.c.0.s8 %v2479
        %v2481 = vperm.slane %v2475, %v2480
        %v2483 = vunpack.c.l.s4 1983009808
        %v2484 = vunpack.c.0.s8 %v2483
        %v2485 = vperm.slane %v2477, %v2484
        %v2486 = vrot.slane %v2457, 4
        %v2487 = vsel %vm982, %v2486, %v2445
        %v2488 = vrot.slane %v2445, 4
        %v2489 = vsel %vm982, %v2457, %v2488
        %v2491 = vunpack.c.l.s4 1934713408
        %v2492 = vunpack.c.0.s8 %v2491
        %v2493 = vperm.slane %v2487, %v2492
        %v2495 = vunpack.c.l.s4 1934713408
        %v2496 = vunpack.c.0.s8 %v2495
        %v2497 = vperm.slane %v2489, %v2496
        %v2498 = vrot.slane %v2461, 4
        %v2499 = vsel %vm982, %v2498, %v2449
        %v2500 = vrot.slane %v2449, 4
        %v2501 = vsel %vm982, %v2461, %v2500
        %v2503 = vunpack.c.l.s4 1934713408
        %v2504 = vunpack.c.0.s8 %v2503
        %v2505 = vperm.slane %v2499, %v2504
        %v2507 = vunpack.c.l.s4 1934713408
        %v2508 = vunpack.c.0.s8 %v2507
        %v2509 = vperm.slane %v2501, %v2508
        %v2510 = vrot.slane %v2481, 4
        %v2511 = vsel %vm982, %v2510, %v2469
        %v2512 = vrot.slane %v2469, 4
        %v2513 = vsel %vm982, %v2481, %v2512
        %v2515 = vunpack.c.l.s4 1934713408
        %v2516 = vunpack.c.0.s8 %v2515
        %v2517 = vperm.slane %v2511, %v2516
        %v2519 = vunpack.c.l.s4 1934713408
        %v2520 = vunpack.c.0.s8 %v2519
        %v2521 = vperm.slane %v2513, %v2520
        %v2522 = vrot.slane %v2485, 4
        %v2523 = vsel %vm982, %v2522, %v2473
        %v2524 = vrot.slane %v2473, 4
        %v2525 = vsel %vm982, %v2485, %v2524
        %v2527 = vunpack.c.l.s4 1934713408
        %v2528 = vunpack.c.0.s8 %v2527
        %v2529 = vperm.slane %v2523, %v2528
        %v2531 = vunpack.c.l.s4 1934713408
        %v2532 = vunpack.c.0.s8 %v2531
        %v2533 = vperm.slane %v2525, %v2532
        %v2534 = vrot.slane %v2517, 4
        %v2535 = vsel %vm982, %v2534, %v2493
        %v2536 = vrot.slane %v2493, 4
        %v2537 = vsel %vm982, %v2517, %v2536
        %v2538 = vrot.slane %v2521, 4
        %v2539 = vsel %vm982, %v2538, %v2497
        %v2540 = vrot.slane %v2497, 4
        %v2541 = vsel %vm982, %v2521, %v2540
        %v2542 = vrot.slane %v2529, 4
        %v2543 = vsel %vm982, %v2542, %v2505
        %v2544 = vrot.slane %v2505, 4
        %v2545 = vsel %vm982, %v2529, %v2544
        %v2546 = vrot.slane %v2533, 4
        %v2547 = vsel %vm982, %v2546, %v2509
        %v2548 = vrot.slane %v2509, 4
        %v2549 = vsel %vm982, %v2533, %v2548
        %v2550 = vrot.slane %v811, 4
        %v2551 = vsel %vm982, %v2550, %v785
        %v2552 = vrot.slane %v785, 4
        %v2553 = vsel %vm982, %v811, %v2552
        %v2555 = vunpack.c.l.s4 1983009808
        %v2556 = vunpack.c.0.s8 %v2555
        %v2557 = vperm.slane %v2551, %v2556
        %v2559 = vunpack.c.l.s4 1983009808
        %v2560 = vunpack.c.0.s8 %v2559
        %v2561 = vperm.slane %v2553, %v2560
        %v2562 = vrot.slane %v824, 4
        %v2563 = vsel %vm982, %v2562, %v798
        %v2564 = vrot.slane %v798, 4
        %v2565 = vsel %vm982, %v824, %v2564
        %v2567 = vunpack.c.l.s4 1983009808
        %v2568 = vunpack.c.0.s8 %v2567
        %v2569 = vperm.slane %v2563, %v2568
        %v2571 = vunpack.c.l.s4 1983009808
        %v2572 = vunpack.c.0.s8 %v2571
        %v2573 = vperm.slane %v2565, %v2572
        %v2574 = vrot.slane %v863, 4
        %v2575 = vsel %vm982, %v2574, %v837
        %v2576 = vrot.slane %v837, 4
        %v2577 = vsel %vm982, %v863, %v2576
        %v2579 = vunpack.c.l.s4 1983009808
        %v2580 = vunpack.c.0.s8 %v2579
        %v2581 = vperm.slane %v2575, %v2580
        %v2583 = vunpack.c.l.s4 1983009808
        %v2584 = vunpack.c.0.s8 %v2583
        %v2585 = vperm.slane %v2577, %v2584
        %v2586 = vrot.slane %v876, 4
        %v2587 = vsel %vm982, %v2586, %v850
        %v2588 = vrot.slane %v850, 4
        %v2589 = vsel %vm982, %v876, %v2588
        %v2591 = vunpack.c.l.s4 1983009808
        %v2592 = vunpack.c.0.s8 %v2591
        %v2593 = vperm.slane %v2587, %v2592
        %v2595 = vunpack.c.l.s4 1983009808
        %v2596 = vunpack.c.0.s8 %v2595
        %v2597 = vperm.slane %v2589, %v2596
        %v2598 = vrot.slane %v2569, 4
        %v2599 = vsel %vm982, %v2598, %v2557
        %v2600 = vrot.slane %v2557, 4
        %v2601 = vsel %vm982, %v2569, %v2600
        %v2603 = vunpack.c.l.s4 1934713408
        %v2604 = vunpack.c.0.s8 %v2603
        %v2605 = vperm.slane %v2599, %v2604
        %v2607 = vunpack.c.l.s4 1934713408
        %v2608 = vunpack.c.0.s8 %v2607
        %v2609 = vperm.slane %v2601, %v2608
        %v2610 = vrot.slane %v2573, 4
        %v2611 = vsel %vm982, %v2610, %v2561
        %v2612 = vrot.slane %v2561, 4
        %v2613 = vsel %vm982, %v2573, %v2612
        %v2615 = vunpack.c.l.s4 1934713408
        %v2616 = vunpack.c.0.s8 %v2615
        %v2617 = vperm.slane %v2611, %v2616
        %v2619 = vunpack.c.l.s4 1934713408
        %v2620 = vunpack.c.0.s8 %v2619
        %v2621 = vperm.slane %v2613, %v2620
        %v2622 = vrot.slane %v2593, 4
        %v2623 = vsel %vm982, %v2622, %v2581
        %v2624 = vrot.slane %v2581, 4
        %v2625 = vsel %vm982, %v2593, %v2624
        %v2627 = vunpack.c.l.s4 1934713408
        %v2628 = vunpack.c.0.s8 %v2627
        %v2629 = vperm.slane %v2623, %v2628
        %v2631 = vunpack.c.l.s4 1934713408
        %v2632 = vunpack.c.0.s8 %v2631
        %v2633 = vperm.slane %v2625, %v2632
        %v2634 = vrot.slane %v2597, 4
        %v2635 = vsel %vm982, %v2634, %v2585
        %v2636 = vrot.slane %v2585, 4
        %v2637 = vsel %vm982, %v2597, %v2636
        %v2639 = vunpack.c.l.s4 1934713408
        %v2640 = vunpack.c.0.s8 %v2639
        %v2641 = vperm.slane %v2635, %v2640
        %v2643 = vunpack.c.l.s4 1934713408
        %v2644 = vunpack.c.0.s8 %v2643
        %v2645 = vperm.slane %v2637, %v2644
        %v2646 = vrot.slane %v2629, 4
        %v2647 = vsel %vm982, %v2646, %v2605
        %v2648 = vrot.slane %v2605, 4
        %v2649 = vsel %vm982, %v2629, %v2648
        %v2650 = vrot.slane %v2633, 4
        %v2651 = vsel %vm982, %v2650, %v2609
        %v2652 = vrot.slane %v2609, 4
        %v2653 = vsel %vm982, %v2633, %v2652
        %v2654 = vrot.slane %v2641, 4
        %v2655 = vsel %vm982, %v2654, %v2617
        %v2656 = vrot.slane %v2617, 4
        %v2657 = vsel %vm982, %v2641, %v2656
        %v2658 = vrot.slane %v2645, 4
        %v2659 = vsel %vm982, %v2658, %v2621
        %v2660 = vrot.slane %v2621, 4
        %v2661 = vsel %vm982, %v2645, %v2660
        %v2662 = vrot.slane %v915, 4
        %v2663 = vsel %vm982, %v2662, %v889
        %v2664 = vrot.slane %v889, 4
        %v2665 = vsel %vm982, %v915, %v2664
        %v2667 = vunpack.c.l.s4 1983009808
        %v2668 = vunpack.c.0.s8 %v2667
        %v2669 = vperm.slane %v2663, %v2668
        %v2671 = vunpack.c.l.s4 1983009808
        %v2672 = vunpack.c.0.s8 %v2671
        %v2673 = vperm.slane %v2665, %v2672
        %v2674 = vrot.slane %v928, 4
        %v2675 = vsel %vm982, %v2674, %v902
        %v2676 = vrot.slane %v902, 4
        %v2677 = vsel %vm982, %v928, %v2676
        %v2679 = vunpack.c.l.s4 1983009808
        %v2680 = vunpack.c.0.s8 %v2679
        %v2681 = vperm.slane %v2675, %v2680
        %v2683 = vunpack.c.l.s4 1983009808
        %v2684 = vunpack.c.0.s8 %v2683
        %v2685 = vperm.slane %v2677, %v2684
        %v2686 = vrot.slane %v967, 4
        %v2687 = vsel %vm982, %v2686, %v941
        %v2688 = vrot.slane %v941, 4
        %v2689 = vsel %vm982, %v967, %v2688
        %v2691 = vunpack.c.l.s4 1983009808
        %v2692 = vunpack.c.0.s8 %v2691
        %v2693 = vperm.slane %v2687, %v2692
        %v2695 = vunpack.c.l.s4 1983009808
        %v2696 = vunpack.c.0.s8 %v2695
        %v2697 = vperm.slane %v2689, %v2696
        %v2698 = vrot.slane %v980, 4
        %v2699 = vsel %vm982, %v2698, %v954
        %v2700 = vrot.slane %v954, 4
        %v2701 = vsel %vm982, %v980, %v2700
        %v2703 = vunpack.c.l.s4 1983009808
        %v2704 = vunpack.c.0.s8 %v2703
        %v2705 = vperm.slane %v2699, %v2704
        %v2707 = vunpack.c.l.s4 1983009808
        %v2708 = vunpack.c.0.s8 %v2707
        %v2709 = vperm.slane %v2701, %v2708
        %v2710 = vrot.slane %v2681, 4
        %v2711 = vsel %vm982, %v2710, %v2669
        %v2712 = vrot.slane %v2669, 4
        %v2713 = vsel %vm982, %v2681, %v2712
        %v2715 = vunpack.c.l.s4 1934713408
        %v2716 = vunpack.c.0.s8 %v2715
        %v2717 = vperm.slane %v2711, %v2716
        %v2719 = vunpack.c.l.s4 1934713408
        %v2720 = vunpack.c.0.s8 %v2719
        %v2721 = vperm.slane %v2713, %v2720
        %v2722 = vrot.slane %v2685, 4
        %v2723 = vsel %vm982, %v2722, %v2673
        %v2724 = vrot.slane %v2673, 4
        %v2725 = vsel %vm982, %v2685, %v2724
        %v2727 = vunpack.c.l.s4 1934713408
        %v2728 = vunpack.c.0.s8 %v2727
        %v2729 = vperm.slane %v2723, %v2728
        %v2731 = vunpack.c.l.s4 1934713408
        %v2732 = vunpack.c.0.s8 %v2731
        %v2733 = vperm.slane %v2725, %v2732
        %v2734 = vrot.slane %v2705, 4
        %v2735 = vsel %vm982, %v2734, %v2693
        %v2736 = vrot.slane %v2693, 4
        %v2737 = vsel %vm982, %v2705, %v2736
        %v2739 = vunpack.c.l.s4 1934713408
        %v2740 = vunpack.c.0.s8 %v2739
        %v2741 = vperm.slane %v2735, %v2740
        %v2743 = vunpack.c.l.s4 1934713408
        %v2744 = vunpack.c.0.s8 %v2743
        %v2745 = vperm.slane %v2737, %v2744
        %v2746 = vrot.slane %v2709, 4
        %v2747 = vsel %vm982, %v2746, %v2697
        %v2748 = vrot.slane %v2697, 4
        %v2749 = vsel %vm982, %v2709, %v2748
        %v2751 = vunpack.c.l.s4 1934713408
        %v2752 = vunpack.c.0.s8 %v2751
        %v2753 = vperm.slane %v2747, %v2752
        %v2755 = vunpack.c.l.s4 1934713408
        %v2756 = vunpack.c.0.s8 %v2755
        %v2757 = vperm.slane %v2749, %v2756
        %v2758 = vrot.slane %v2741, 4
        %v2759 = vsel %vm982, %v2758, %v2717
        %v2760 = vrot.slane %v2717, 4
        %v2761 = vsel %vm982, %v2741, %v2760
        %v2762 = vrot.slane %v2745, 4
        %v2763 = vsel %vm982, %v2762, %v2721
        %v2764 = vrot.slane %v2721, 4
        %v2765 = vsel %vm982, %v2745, %v2764
        %v2766 = vrot.slane %v2753, 4
        %v2767 = vsel %vm982, %v2766, %v2729
        %v2768 = vrot.slane %v2729, 4
        %v2769 = vsel %vm982, %v2753, %v2768
        %v2770 = vrot.slane %v2757, 4
        %v2771 = vsel %vm982, %v2770, %v2733
        %v2772 = vrot.slane %v2733, 4
        %v2773 = vsel %vm982, %v2757, %v2772
        %2782 = vrot.lane.b32.xlu0 %v1081, 2
        %v2783 = vpop.permute.xlu0 %2782
        %2784 = vrot.lane.b32.xlu0 %v1193, 2
        %v2785 = vpop.permute.xlu0 %2784
        %2786 = vrot.lane.b32.xlu0 %v1305, 2
        %v2787 = vpop.permute.xlu0 %2786
        %2788 = vrot.lane.b32.xlu0 %v1417, 2
        %v2789 = vpop.permute.xlu0 %2788
        %2790 = vrot.lane.b32.xlu0 %v1529, 2
        %v2791 = vpop.permute.xlu0 %2790
        %2792 = vrot.lane.b32.xlu0 %v1641, 2
        %v2793 = vpop.permute.xlu0 %2792
        %2794 = vrot.lane.b32.xlu0 %v1753, 2
        %v2795 = vpop.permute.xlu0 %2794
        %2796 = vrot.lane.b32.xlu0 %v1865, 2
        %v2797 = vpop.permute.xlu0 %2796
        %2814 = vrot.lane.b32.xlu0 %v1083, 4
        %v2815 = vpop.permute.xlu0 %2814
        %2816 = vrot.lane.b32.xlu0 %v1195, 4
        %v2817 = vpop.permute.xlu0 %2816
        %2818 = vrot.lane.b32.xlu0 %v1307, 4
        %v2819 = vpop.permute.xlu0 %2818
        %2820 = vrot.lane.b32.xlu0 %v1419, 4
        %v2821 = vpop.permute.xlu0 %2820
        %2822 = vrot.lane.b32.xlu0 %v1531, 4
        %v2823 = vpop.permute.xlu0 %2822
        %2824 = vrot.lane.b32.xlu0 %v1643, 4
        %v2825 = vpop.permute.xlu0 %2824
        %2826 = vrot.lane.b32.xlu0 %v1755, 4
        %v2827 = vpop.permute.xlu0 %2826
        %2828 = vrot.lane.b32.xlu0 %v1867, 4
        %v2829 = vpop.permute.xlu0 %2828
        %2846 = vrot.lane.b32.xlu0 %v1085, 6
        %v2847 = vpop.permute.xlu0 %2846
        %2848 = vrot.lane.b32.xlu0 %v1197, 6
        %v2849 = vpop.permute.xlu0 %2848
        %2850 = vrot.lane.b32.xlu0 %v1309, 6
        %v2851 = vpop.permute.xlu0 %2850
        %2852 = vrot.lane.b32.xlu0 %v1421, 6
        %v2853 = vpop.permute.xlu0 %2852
        %2854 = vrot.lane.b32.xlu0 %v1533, 6
        %v2855 = vpop.permute.xlu0 %2854
        %2856 = vrot.lane.b32.xlu0 %v1645, 6
        %v2857 = vpop.permute.xlu0 %2856
        %2858 = vrot.lane.b32.xlu0 %v1757, 6
        %v2859 = vpop.permute.xlu0 %2858
        %2860 = vrot.lane.b32.xlu0 %v1869, 6
        %v2861 = vpop.permute.xlu0 %2860
        %2878 = vrot.lane.b32.xlu0 %v1087, 8
        %v2879 = vpop.permute.xlu0 %2878
        %2880 = vrot.lane.b32.xlu0 %v1199, 8
        %v2881 = vpop.permute.xlu0 %2880
        %2882 = vrot.lane.b32.xlu0 %v1311, 8
        %v2883 = vpop.permute.xlu0 %2882
        %2884 = vrot.lane.b32.xlu0 %v1423, 8
        %v2885 = vpop.permute.xlu0 %2884
        %2886 = vrot.lane.b32.xlu0 %v1535, 8
        %v2887 = vpop.permute.xlu0 %2886
        %2888 = vrot.lane.b32.xlu0 %v1647, 8
        %v2889 = vpop.permute.xlu0 %2888
        %2890 = vrot.lane.b32.xlu0 %v1759, 8
        %v2891 = vpop.permute.xlu0 %2890
        %2892 = vrot.lane.b32.xlu0 %v1871, 8
        %v2893 = vpop.permute.xlu0 %2892
        %2910 = vrot.lane.b32.xlu0 %v1089, 10
        %v2911 = vpop.permute.xlu0 %2910
        %2912 = vrot.lane.b32.xlu0 %v1201, 10
        %v2913 = vpop.permute.xlu0 %2912
        %2914 = vrot.lane.b32.xlu0 %v1313, 10
        %v2915 = vpop.permute.xlu0 %2914
        %2916 = vrot.lane.b32.xlu0 %v1425, 10
        %v2917 = vpop.permute.xlu0 %2916
        %2918 = vrot.lane.b32.xlu0 %v1537, 10
        %v2919 = vpop.permute.xlu0 %2918
        %2920 = vrot.lane.b32.xlu0 %v1649, 10
        %v2921 = vpop.permute.xlu0 %2920
        %2922 = vrot.lane.b32.xlu0 %v1761, 10
        %v2923 = vpop.permute.xlu0 %2922
        %2924 = vrot.lane.b32.xlu0 %v1873, 10
        %v2925 = vpop.permute.xlu0 %2924
        %2942 = vrot.lane.b32.xlu0 %v1091, 12
        %v2943 = vpop.permute.xlu0 %2942
        %2944 = vrot.lane.b32.xlu0 %v1203, 12
        %v2945 = vpop.permute.xlu0 %2944
        %2946 = vrot.lane.b32.xlu0 %v1315, 12
        %v2947 = vpop.permute.xlu0 %2946
        %2948 = vrot.lane.b32.xlu0 %v1427, 12
        %v2949 = vpop.permute.xlu0 %2948
        %2950 = vrot.lane.b32.xlu0 %v1539, 12
        %v2951 = vpop.permute.xlu0 %2950
        %2952 = vrot.lane.b32.xlu0 %v1651, 12
        %v2953 = vpop.permute.xlu0 %2952
        %2954 = vrot.lane.b32.xlu0 %v1763, 12
        %v2955 = vpop.permute.xlu0 %2954
        %2956 = vrot.lane.b32.xlu0 %v1875, 12
        %v2957 = vpop.permute.xlu0 %2956
        %2974 = vrot.lane.b32.xlu0 %v1093, 14
        %v2975 = vpop.permute.xlu0 %2974
        %2976 = vrot.lane.b32.xlu0 %v1205, 14
        %v2977 = vpop.permute.xlu0 %2976
        %2978 = vrot.lane.b32.xlu0 %v1317, 14
        %v2979 = vpop.permute.xlu0 %2978
        %2980 = vrot.lane.b32.xlu0 %v1429, 14
        %v2981 = vpop.permute.xlu0 %2980
        %2982 = vrot.lane.b32.xlu0 %v1541, 14
        %v2983 = vpop.permute.xlu0 %2982
        %2984 = vrot.lane.b32.xlu0 %v1653, 14
        %v2985 = vpop.permute.xlu0 %2984
        %2986 = vrot.lane.b32.xlu0 %v1765, 14
        %v2987 = vpop.permute.xlu0 %2986
        %2988 = vrot.lane.b32.xlu0 %v1877, 14
        %v2989 = vpop.permute.xlu0 %2988
        %3006 = vrot.lane.b32.xlu0 %v1975, 16
        %v3007 = vpop.permute.xlu0 %3006
        %3008 = vrot.lane.b32.xlu0 %v2087, 16
        %v3009 = vpop.permute.xlu0 %3008
        %3010 = vrot.lane.b32.xlu0 %v2199, 16
        %v3011 = vpop.permute.xlu0 %3010
        %3012 = vrot.lane.b32.xlu0 %v2311, 16
        %v3013 = vpop.permute.xlu0 %3012
        %3014 = vrot.lane.b32.xlu0 %v2423, 16
        %v3015 = vpop.permute.xlu0 %3014
        %3016 = vrot.lane.b32.xlu0 %v2535, 16
        %v3017 = vpop.permute.xlu0 %3016
        %3018 = vrot.lane.b32.xlu0 %v2647, 16
        %v3019 = vpop.permute.xlu0 %3018
        %3020 = vrot.lane.b32.xlu0 %v2759, 16
        %v3021 = vpop.permute.xlu0 %3020
        %3038 = vrot.lane.b32.xlu0 %v1977, 18
        %v3039 = vpop.permute.xlu0 %3038
        %3040 = vrot.lane.b32.xlu0 %v2089, 18
        %v3041 = vpop.permute.xlu0 %3040
        %3042 = vrot.lane.b32.xlu0 %v2201, 18
        %v3043 = vpop.permute.xlu0 %3042
        %3044 = vrot.lane.b32.xlu0 %v2313, 18
        %v3045 = vpop.permute.xlu0 %3044
        %3046 = vrot.lane.b32.xlu0 %v2425, 18
        %v3047 = vpop.permute.xlu0 %3046
        %3048 = vrot.lane.b32.xlu0 %v2537, 18
        %v3049 = vpop.permute.xlu0 %3048
        %3050 = vrot.lane.b32.xlu0 %v2649, 18
        %v3051 = vpop.permute.xlu0 %3050
        %3052 = vrot.lane.b32.xlu0 %v2761, 18
        %v3053 = vpop.permute.xlu0 %3052
        %3070 = vrot.lane.b32.xlu0 %v1979, 20
        %v3071 = vpop.permute.xlu0 %3070
        %3072 = vrot.lane.b32.xlu0 %v2091, 20
        %v3073 = vpop.permute.xlu0 %3072
        %3074 = vrot.lane.b32.xlu0 %v2203, 20
        %v3075 = vpop.permute.xlu0 %3074
        %3076 = vrot.lane.b32.xlu0 %v2315, 20
        %v3077 = vpop.permute.xlu0 %3076
        %3078 = vrot.lane.b32.xlu0 %v2427, 20
        %v3079 = vpop.permute.xlu0 %3078
        %3080 = vrot.lane.b32.xlu0 %v2539, 20
        %v3081 = vpop.permute.xlu0 %3080
        %3082 = vrot.lane.b32.xlu0 %v2651, 20
        %v3083 = vpop.permute.xlu0 %3082
        %3084 = vrot.lane.b32.xlu0 %v2763, 20
        %v3085 = vpop.permute.xlu0 %3084
        %3102 = vrot.lane.b32.xlu0 %v1981, 22
        %v3103 = vpop.permute.xlu0 %3102
        %3104 = vrot.lane.b32.xlu0 %v2093, 22
        %v3105 = vpop.permute.xlu0 %3104
        %3106 = vrot.lane.b32.xlu0 %v2205, 22
        %v3107 = vpop.permute.xlu0 %3106
        %3108 = vrot.lane.b32.xlu0 %v2317, 22
        %v3109 = vpop.permute.xlu0 %3108
        %3110 = vrot.lane.b32.xlu0 %v2429, 22
        %v3111 = vpop.permute.xlu0 %3110
        %3112 = vrot.lane.b32.xlu0 %v2541, 22
        %v3113 = vpop.permute.xlu0 %3112
        %3114 = vrot.lane.b32.xlu0 %v2653, 22
        %v3115 = vpop.permute.xlu0 %3114
        %3116 = vrot.lane.b32.xlu0 %v2765, 22
        %v3117 = vpop.permute.xlu0 %3116
        %3134 = vrot.lane.b32.xlu0 %v1983, 24
        %v3135 = vpop.permute.xlu0 %3134
        %3136 = vrot.lane.b32.xlu0 %v2095, 24
        %v3137 = vpop.permute.xlu0 %3136
        %3138 = vrot.lane.b32.xlu0 %v2207, 24
        %v3139 = vpop.permute.xlu0 %3138
        %3140 = vrot.lane.b32.xlu0 %v2319, 24
        %v3141 = vpop.permute.xlu0 %3140
        %3142 = vrot.lane.b32.xlu0 %v2431, 24
        %v3143 = vpop.permute.xlu0 %3142
        %3144 = vrot.lane.b32.xlu0 %v2543, 24
        %v3145 = vpop.permute.xlu0 %3144
        %3146 = vrot.lane.b32.xlu0 %v2655, 24
        %v3147 = vpop.permute.xlu0 %3146
        %3148 = vrot.lane.b32.xlu0 %v2767, 24
        %v3149 = vpop.permute.xlu0 %3148
        %3166 = vrot.lane.b32.xlu0 %v1985, 26
        %v3167 = vpop.permute.xlu0 %3166
        %3168 = vrot.lane.b32.xlu0 %v2097, 26
        %v3169 = vpop.permute.xlu0 %3168
        %3170 = vrot.lane.b32.xlu0 %v2209, 26
        %v3171 = vpop.permute.xlu0 %3170
        %3172 = vrot.lane.b32.xlu0 %v2321, 26
        %v3173 = vpop.permute.xlu0 %3172
        %3174 = vrot.lane.b32.xlu0 %v2433, 26
        %v3175 = vpop.permute.xlu0 %3174
        %3176 = vrot.lane.b32.xlu0 %v2545, 26
        %v3177 = vpop.permute.xlu0 %3176
        %3178 = vrot.lane.b32.xlu0 %v2657, 26
        %v3179 = vpop.permute.xlu0 %3178
        %3180 = vrot.lane.b32.xlu0 %v2769, 26
        %v3181 = vpop.permute.xlu0 %3180
        %3198 = vrot.lane.b32.xlu0 %v1987, 28
        %v3199 = vpop.permute.xlu0 %3198
        %3200 = vrot.lane.b32.xlu0 %v2099, 28
        %v3201 = vpop.permute.xlu0 %3200
        %3202 = vrot.lane.b32.xlu0 %v2211, 28
        %v3203 = vpop.permute.xlu0 %3202
        %3204 = vrot.lane.b32.xlu0 %v2323, 28
        %v3205 = vpop.permute.xlu0 %3204
        %3206 = vrot.lane.b32.xlu0 %v2435, 28
        %v3207 = vpop.permute.xlu0 %3206
        %3208 = vrot.lane.b32.xlu0 %v2547, 28
        %v3209 = vpop.permute.xlu0 %3208
        %3210 = vrot.lane.b32.xlu0 %v2659, 28
        %v3211 = vpop.permute.xlu0 %3210
        %3212 = vrot.lane.b32.xlu0 %v2771, 28
        %v3213 = vpop.permute.xlu0 %3212
        %3230 = vrot.lane.b32.xlu0 %v1989, 30
        %v3231 = vpop.permute.xlu0 %3230
        %3232 = vrot.lane.b32.xlu0 %v2101, 30
        %v3233 = vpop.permute.xlu0 %3232
        %3234 = vrot.lane.b32.xlu0 %v2213, 30
        %v3235 = vpop.permute.xlu0 %3234
        %3236 = vrot.lane.b32.xlu0 %v2325, 30
        %v3237 = vpop.permute.xlu0 %3236
        %3238 = vrot.lane.b32.xlu0 %v2437, 30
        %v3239 = vpop.permute.xlu0 %3238
        %3240 = vrot.lane.b32.xlu0 %v2549, 30
        %v3241 = vpop.permute.xlu0 %3240
        %3242 = vrot.lane.b32.xlu0 %v2661, 30
        %v3243 = vpop.permute.xlu0 %3242
        %3244 = vrot.lane.b32.xlu0 %v2773, 30
        %v3245 = vpop.permute.xlu0 %3244
        %vm3254 = vcmask 15360
        %v3255 = vsel %vm3254, %v1079, %v2783
        %v3256 = vsel %vm3254, %v1191, %v2785
        %v3257 = vsel %vm3254, %v1303, %v2787
        %v3258 = vsel %vm3254, %v1415, %v2789
        %v3259 = vsel %vm3254, %v1527, %v2791
        %v3260 = vsel %vm3254, %v1639, %v2793
        %v3261 = vsel %vm3254, %v1751, %v2795
        %v3262 = vsel %vm3254, %v1863, %v2797
        %vm3263 = vcmask 31744
        %v3264 = vsel %vm3263, %v3255, %v2815
        %v3265 = vsel %vm3263, %v3256, %v2817
        %v3266 = vsel %vm3263, %v3257, %v2819
        %v3267 = vsel %vm3263, %v3258, %v2821
        %v3268 = vsel %vm3263, %v3259, %v2823
        %v3269 = vsel %vm3263, %v3260, %v2825
        %v3270 = vsel %vm3263, %v3261, %v2827
        %v3271 = vsel %vm3263, %v3262, %v2829
        %vm3272 = vcmask 48128
        %v3273 = vsel %vm3272, %v3264, %v2847
        %v3274 = vsel %vm3272, %v3265, %v2849
        %v3275 = vsel %vm3272, %v3266, %v2851
        %v3276 = vsel %vm3272, %v3267, %v2853
        %v3277 = vsel %vm3272, %v3268, %v2855
        %v3278 = vsel %vm3272, %v3269, %v2857
        %v3279 = vsel %vm3272, %v3270, %v2859
        %v3280 = vsel %vm3272, %v3271, %v2861
        %vm3281 = vcmask 64512
        %v3282 = vsel %vm3281, %v3273, %v2879
        %v3283 = vsel %vm3281, %v3274, %v2881
        %v3284 = vsel %vm3281, %v3275, %v2883
        %v3285 = vsel %vm3281, %v3276, %v2885
        %v3286 = vsel %vm3281, %v3277, %v2887
        %v3287 = vsel %vm3281, %v3278, %v2889
        %v3288 = vsel %vm3281, %v3279, %v2891
        %v3289 = vsel %vm3281, %v3280, %v2893
        %vm3290 = vcmask 80896
        %v3291 = vsel %vm3290, %v3282, %v2911
        %v3292 = vsel %vm3290, %v3283, %v2913
        %v3293 = vsel %vm3290, %v3284, %v2915
        %v3294 = vsel %vm3290, %v3285, %v2917
        %v3295 = vsel %vm3290, %v3286, %v2919
        %v3296 = vsel %vm3290, %v3287, %v2921
        %v3297 = vsel %vm3290, %v3288, %v2923
        %v3298 = vsel %vm3290, %v3289, %v2925
        %vm3299 = vcmask 97280
        %v3300 = vsel %vm3299, %v3291, %v2943
        %v3301 = vsel %vm3299, %v3292, %v2945
        %v3302 = vsel %vm3299, %v3293, %v2947
        %v3303 = vsel %vm3299, %v3294, %v2949
        %v3304 = vsel %vm3299, %v3295, %v2951
        %v3305 = vsel %vm3299, %v3296, %v2953
        %v3306 = vsel %vm3299, %v3297, %v2955
        %v3307 = vsel %vm3299, %v3298, %v2957
        %vm3308 = vcmask 113664
        %v3309 = vsel %vm3308, %v3300, %v2975
        %v3310 = vsel %vm3308, %v3301, %v2977
        %v3311 = vsel %vm3308, %v3302, %v2979
        %v3312 = vsel %vm3308, %v3303, %v2981
        %v3313 = vsel %vm3308, %v3304, %v2983
        %v3314 = vsel %vm3308, %v3305, %v2985
        %v3315 = vsel %vm3308, %v3306, %v2987
        %v3316 = vsel %vm3308, %v3307, %v2989
        %vm3317 = vcmask 130048
        %v3318 = vsel %vm3317, %v3309, %v3007
        %v3319 = vsel %vm3317, %v3310, %v3009
        %v3320 = vsel %vm3317, %v3311, %v3011
        %v3321 = vsel %vm3317, %v3312, %v3013
        %v3322 = vsel %vm3317, %v3313, %v3015
        %v3323 = vsel %vm3317, %v3314, %v3017
        %v3324 = vsel %vm3317, %v3315, %v3019
        %v3325 = vsel %vm3317, %v3316, %v3021
        %vm3326 = vcmask 146432
        %v3327 = vsel %vm3326, %v3318, %v3039
        %v3328 = vsel %vm3326, %v3319, %v3041
        %v3329 = vsel %vm3326, %v3320, %v3043
        %v3330 = vsel %vm3326, %v3321, %v3045
        %v3331 = vsel %vm3326, %v3322, %v3047
        %v3332 = vsel %vm3326, %v3323, %v3049
        %v3333 = vsel %vm3326, %v3324, %v3051
        %v3334 = vsel %vm3326, %v3325, %v3053
        %vm3335 = vcmask 162816
        %v3336 = vsel %vm3335, %v3327, %v3071
        %v3337 = vsel %vm3335, %v3328, %v3073
        %v3338 = vsel %vm3335, %v3329, %v3075
        %v3339 = vsel %vm3335, %v3330, %v3077
        %v3340 = vsel %vm3335, %v3331, %v3079
        %v3341 = vsel %vm3335, %v3332, %v3081
        %v3342 = vsel %vm3335, %v3333, %v3083
        %v3343 = vsel %vm3335, %v3334, %v3085
        %vm3344 = vcmask 179200
        %v3345 = vsel %vm3344, %v3336, %v3103
        %v3346 = vsel %vm3344, %v3337, %v3105
        %v3347 = vsel %vm3344, %v3338, %v3107
        %v3348 = vsel %vm3344, %v3339, %v3109
        %v3349 = vsel %vm3344, %v3340, %v3111
        %v3350 = vsel %vm3344, %v3341, %v3113
        %v3351 = vsel %vm3344, %v3342, %v3115
        %v3352 = vsel %vm3344, %v3343, %v3117
        %vm3353 = vcmask 195584
        %v3354 = vsel %vm3353, %v3345, %v3135
        %v3355 = vsel %vm3353, %v3346, %v3137
        %v3356 = vsel %vm3353, %v3347, %v3139
        %v3357 = vsel %vm3353, %v3348, %v3141
        %v3358 = vsel %vm3353, %v3349, %v3143
        %v3359 = vsel %vm3353, %v3350, %v3145
        %v3360 = vsel %vm3353, %v3351, %v3147
        %v3361 = vsel %vm3353, %v3352, %v3149
        %vm3362 = vcmask 211968
        %v3363 = vsel %vm3362, %v3354, %v3167
        %v3364 = vsel %vm3362, %v3355, %v3169
        %v3365 = vsel %vm3362, %v3356, %v3171
        %v3366 = vsel %vm3362, %v3357, %v3173
        %v3367 = vsel %vm3362, %v3358, %v3175
        %v3368 = vsel %vm3362, %v3359, %v3177
        %v3369 = vsel %vm3362, %v3360, %v3179
        %v3370 = vsel %vm3362, %v3361, %v3181
        %vm3371 = vcmask 228352
        %v3372 = vsel %vm3371, %v3363, %v3199
        %v3373 = vsel %vm3371, %v3364, %v3201
        %v3374 = vsel %vm3371, %v3365, %v3203
        %v3375 = vsel %vm3371, %v3366, %v3205
        %v3376 = vsel %vm3371, %v3367, %v3207
        %v3377 = vsel %vm3371, %v3368, %v3209
        %v3378 = vsel %vm3371, %v3369, %v3211
        %v3379 = vsel %vm3371, %v3370, %v3213
        %vm3380 = vcmask 244736
        %v3381 = vsel %vm3380, %v3372, %v3231
        %v3382 = vsel %vm3380, %v3373, %v3233
        %v3383 = vsel %vm3380, %v3374, %v3235
        %v3384 = vsel %vm3380, %v3375, %v3237
        %v3385 = vsel %vm3380, %v3376, %v3239
        %v3386 = vsel %vm3380, %v3377, %v3241
        %v3387 = vsel %vm3380, %v3378, %v3243
        %v3388 = vsel %vm3380, %v3379, %v3245
        %vm3389 = vcmask 261120
        %3390 = vst.msk [vmem:[%s139] sm:$0xff] %vm3389, %v3381
        %3391 = vst.msk [vmem:[%s139 + $0x8] sm:$0xff] %vm3389, %v3382
        %3392 = vst.msk [vmem:[%s139 + $0x10] sm:$0xff] %vm3389, %v3383
        %3393 = vst.msk [vmem:[%s139 + $0x18] sm:$0xff] %vm3389, %v3384
        %3394 = vst.msk [vmem:[%s139 + $0x20] sm:$0xff] %vm3389, %v3385
        %3395 = vst.msk [vmem:[%s139 + $0x28] sm:$0xff] %vm3389, %v3386
        %3396 = vst.msk [vmem:[%s139 + $0x30] sm:$0xff] %vm3389, %v3387
        %3397 = vst.msk [vmem:[%s139 + $0x38] sm:$0xff] %vm3389, %v3388
        %3406 = vrot.lane.b32.xlu0 %v3381, 32
        %v3407 = vpop.permute.xlu0 %3406
        %3408 = vrot.lane.b32.xlu0 %v3382, 32
        %v3409 = vpop.permute.xlu0 %3408
        %3410 = vrot.lane.b32.xlu0 %v3383, 32
        %v3411 = vpop.permute.xlu0 %3410
        %3412 = vrot.lane.b32.xlu0 %v3384, 32
        %v3413 = vpop.permute.xlu0 %3412
        %3414 = vrot.lane.b32.xlu0 %v3385, 32
        %v3415 = vpop.permute.xlu0 %3414
        %3416 = vrot.lane.b32.xlu0 %v3386, 32
        %v3417 = vpop.permute.xlu0 %3416
        %3418 = vrot.lane.b32.xlu0 %v3387, 32
        %v3419 = vpop.permute.xlu0 %3418
        %3420 = vrot.lane.b32.xlu0 %v3388, 32
        %v3421 = vpop.permute.xlu0 %3420
        %vm3430 = vcmask 523520
        %3431 = vst.msk [vmem:[%s139] sm:$0xff] %vm3430, %v3407
        %3432 = vst.msk [vmem:[%s139 + $0x8] sm:$0xff] %vm3430, %v3409
        %3433 = vst.msk [vmem:[%s139 + $0x10] sm:$0xff] %vm3430, %v3411
        %3434 = vst.msk [vmem:[%s139 + $0x18] sm:$0xff] %vm3430, %v3413
        %3435 = vst.msk [vmem:[%s139 + $0x20] sm:$0xff] %vm3430, %v3415
        %3436 = vst.msk [vmem:[%s139 + $0x28] sm:$0xff] %vm3430, %v3417
        %3437 = vst.msk [vmem:[%s139 + $0x30] sm:$0xff] %vm3430, %v3419
        %3438 = vst.msk [vmem:[%s139 + $0x38] sm:$0xff] %vm3430, %v3421
        %s3439 = smul.u32 8, %s15
        %p3440 = scmp.lt.s32.totalorder %s3439, 15
        %s3441 = scalar_select %p3440, %s3439, 15
        %s3442 = smul.addr %s3441, 8
        %s3443 = scalar_lea.vmem %s1, %s3442
        // Predicated region
        $region29: #{upsample_nearest_2x.1} parent=23 // pred_check
          %p3444 = pneg %p59
        $region30: #{upsample_nearest_2x.1} parent=23 // pred_check_branch
          %3446 = sbr.rel (%p3444) target = $region32
        $region31: #{upsample_nearest_2x.1} parent=23 // pred_region
          %s3447 = smul.u32 8, %s15
        $region32: #{upsample_nearest_2x.1} parent=23 // pred_fallthru
          _
      $region24: #{upsample_nearest_2x.1} parent=5 // pred_fallthru
        _
      %p3448 = scmp.le.s32.totalorder 2, %s10
      // Predicated region
      $region33: #{upsample_nearest_2x.1} parent=5 // pred_check
        %p3449 = pneg %p3448
      $region34: #{upsample_nearest_2x.1} parent=5 // pred_check_branch
        %3451 = sbr.rel (%p3449) target = $region36
      $region35: #{upsample_nearest_2x.1} parent=5 // pred_region
        %s3452 = ssub.s32 %s10, 2
        // Predicated region
        $region37: #{upsample_nearest_2x.1} parent=35 // pred_check
          %p3453 = pneg %p65
        $region38: #{upsample_nearest_2x.1} parent=35 // pred_check_branch
          %3455 = sbr.rel (%p3453) target = $region40
        $region39: #{upsample_nearest_2x.1} parent=35 // pred_region
          %s3456 = smul.u32 8, %s16
          %p3457 = scmp.lt.s32.totalorder %s3456, 15
          %s3458 = scalar_select %p3457, %s3456, 15
          %s3459 = smul.addr %s3458, 8
          %s3460 = scalar_lea.vmem %s1, %s3459
        $region40: #{upsample_nearest_2x.1} parent=35 // pred_fallthru
          _
      $region36: #{upsample_nearest_2x.1} parent=5 // pred_fallthru
        _
    $region6: #{upsample_nearest_2x.1} parent=1 // loop_footer
      %s14 = sadd.s32 1, %s10
    $region7: #{upsample_nearest_2x.1} parent=1 // loop_footer_branch
      %9 = sbr.rel target = $region3
    $region8: #{upsample_nearest_2x.1} parent=1 // loop_exit
      _
    %3461 = vsyncpa [#allocation3], 1
    %s3462 = scalar_lea.sflag [#allocation3], 1
    %3463 = vsyncpa %s3462, 1

</llo_original>
